<compile_context>
chip_gen: v7x
topology: tpu7x:2x2x1
jax: 0.10.0
libtpu: 0.0.40
codegen_flags: <defaults>
</compile_context>

<pallas_src>
import functools

import jax
import jax.numpy as jnp
from jax.experimental import pallas as pl
from jax.experimental.pallas import tpu as pltpu

ALPHA = 1.0
NEG_SLOPE = 0.01  # torch.nn.LeakyReLU default


def _lrelu(v):
    # For 0 < NEG_SLOPE < 1 this equals LeakyReLU; 2 VALU ops (mul+max).
    return jnp.maximum(v, NEG_SLOPE * v)


def _round_up(x, m):
    return (x + m - 1) // m * m


def autodis_kernel(x_ref, w1_ref, b1_ref, rw_ref, rb_ref, w2_ref, b2_ref,
                   tau_ref, emb_ref, out_ref, *, feature_num):
    # x_ref   : (tn, F*K)      bf16   batch tile
    # w1_ref  : (F*K, F*L)     bf16   block-diag linear1 weight
    # b1_ref  : (1, F*L)       f32
    # rw_ref  : (NB, F*L, F*L) bf16   block-diag ResBlock weights
    # rb_ref  : (NB, 1, F*L)   f32
    # w2_ref  : (F*L, F*B)     bf16   block-diag linear2 weight
    # b2_ref  : (1, F*B)       f32
    # tau_ref : (1, F*B)       f32    temperature
    # emb_ref : (F*B, F*D)     bf16   block-diag bucket embeddings
    # out_ref : (tn, F*D)      f32
    F = feature_num
    NB = rw_ref.shape[0]
    FB = w2_ref.shape[1]
    FD = emb_ref.shape[1]
    B = FB // F
    D = FD // F

    # linear1 (all features at once) + bias + LeakyReLU; dropout p=0.
    h = jnp.dot(x_ref[...], w1_ref[...], preferred_element_type=jnp.float32)
    h = _lrelu(h + b1_ref[...])                              # (tn, F*L) f32

    # ResBlocks: h = LeakyReLU(h @ W + b + alpha*h); alpha == 1 -> plain add.
    for i in range(NB):                                      # static unroll
        skip = h if ALPHA == 1.0 else ALPHA * h
        h = _lrelu(jnp.dot(h.astype(jnp.bfloat16), rw_ref[i],
                           preferred_element_type=jnp.float32)
                   + rb_ref[i] + skip)                       # (tn, F*L)

    # linear2 + LeakyReLU, scaled by temperature (fused across features).
    logits = jnp.dot(h.astype(jnp.bfloat16), w2_ref[...],
                     preferred_element_type=jnp.float32) + b2_ref[...]
    logits = _lrelu(logits) * tau_ref[...]                   # (tn, F*B)

    # Per-feature (8-lane-group) max subtraction, then one fused exp.
    shifted = jnp.concatenate(
        [logits[:, f * B:(f + 1) * B]
         - jnp.max(logits[:, f * B:(f + 1) * B], axis=-1, keepdims=True)
         for f in range(F)], axis=-1)
    e = jnp.exp(shifted)                                     # (tn, F*B)

    # Unnormalized bucket-embedding mix on the MXU. Result already has the
    # lane-dense (tn, F*D) output layout (== torch.flatten(x, -2)).
    u = jnp.dot(e.astype(jnp.bfloat16), emb_ref[...],
                preferred_element_type=jnp.float32)          # (tn, F*D)

    # Normalize each feature's 128-lane slab by its softmax denominator and
    # store directly via static, lane-aligned slice stores (no concat temp).
    for f in range(F):
        s = jnp.sum(e[:, f * B:(f + 1) * B], axis=-1, keepdims=True)  # (tn, 1)
        out_ref[:, f * D:(f + 1) * D] = (
            u[:, f * D:(f + 1) * D] * pl.reciprocal(s, approx=True)
        ).astype(out_ref.dtype)


def _block_diag(blocks):
    """(F, a, b) -> (F*a, F*b) block-diagonal matrix."""
    F, a, b = blocks.shape
    eye = jnp.eye(F, dtype=blocks.dtype)
    out = eye[:, :, None, None] * blocks[:, None, :, :]      # (F, F, a, b)
    return out.transpose(0, 2, 1, 3).reshape(F * a, F * b)


@functools.partial(jax.jit, static_argnames=("tile_n",))
def autodis_forward(x, w1, b1, rw, rb, w2, b2, tau, emb, *, tile_n=1024):
    """x: (N, F, 3) float32 -> (N, F*D) float32."""
    N, F, K = x.shape
    L = w1.shape[-1]
    NB = rw.shape[1]
    B = w2.shape[-1]
    D = emb.shape[-1]
    FL, FB, FD = F * L, F * B, F * D

    # Batch tile: multiple of 8, big enough to amortize per-step overhead,
    # capped near N/2 so there are >=2 grid steps when possible (v7x 2 TCs).
    tn = min(tile_n, max(8, _round_up(pl.cdiv(N, 2), 8)))
    n_pad = _round_up(N, tn)

    # Free reshape (N,F,K)->(N,F*K); bf16 for the MXU fast path.
    x2 = x.reshape(N, F * K).astype(jnp.bfloat16)
    if n_pad != N:
        x2 = jnp.pad(x2, ((0, n_pad - N), (0, 0)))

    # Block-diagonal fused weights, built ONCE here (outside the kernel) and
    # passed as grid-invariant inputs (index_map -> 0, resident in VMEM).
    w1_bd = _block_diag(w1).astype(jnp.bfloat16)                       # (F*K, F*L)
    rw_bd = jnp.stack([_block_diag(rw[:, i]) for i in range(NB)],
                      axis=0).astype(jnp.bfloat16)                     # (NB, F*L, F*L)
    w2_bd = _block_diag(w2).astype(jnp.bfloat16)                       # (F*L, F*B)
    emb_bd = _block_diag(emb).astype(jnp.bfloat16)                     # (F*B, F*D)
    b1_f = b1[:, 0, :].reshape(1, FL)
    rb_f = rb[:, :, 0, :].transpose(1, 0, 2).reshape(NB, 1, FL)
    b2_f = b2[:, 0, :].reshape(1, FB)
    tau_f = tau[:, 0, :].reshape(1, FB)

    kernel = functools.partial(autodis_kernel, feature_num=F)

    grid_spec = pltpu.PrefetchScalarGridSpec(
        num_scalar_prefetch=0,
        grid=(n_pad // tn,),
        in_specs=[
            pl.BlockSpec((tn, F * K), lambda n: (n, 0)),        # x tile
            pl.BlockSpec((F * K, FL), lambda n: (0, 0)),        # W1 block-diag
            pl.BlockSpec((1, FL), lambda n: (0, 0)),            # b1
            pl.BlockSpec((NB, FL, FL), lambda n: (0, 0, 0)),    # ResBlock W
            pl.BlockSpec((NB, 1, FL), lambda n: (0, 0, 0)),     # ResBlock b
            pl.BlockSpec((FL, FB), lambda n: (0, 0)),           # W2 block-diag
            pl.BlockSpec((1, FB), lambda n: (0, 0)),            # b2
            pl.BlockSpec((1, FB), lambda n: (0, 0)),            # tau
            pl.BlockSpec((FB, FD), lambda n: (0, 0)),           # emb block-diag
        ],
        out_specs=pl.BlockSpec((tn, FD), lambda n: (n, 0)),
    )

    out = pl.pallas_call(
        kernel,
        out_shape=jax.ShapeDtypeStruct((n_pad, FD), jnp.float32),
        grid_spec=grid_spec,
        compiler_params=pltpu.CompilerParams(
            dimension_semantics=("parallel",)),   # batch tiles are independent
    )(x2, w1_bd, b1_f, rw_bd, rb_f, w2_bd, b2_f, tau_f, emb_bd)

    return out[:N] if n_pad != N else out


def reference_forward(x, w1, b1, rw, rb, w2, b2, tau, emb):
    """Pure-JAX mirror of the torch forward (f32 HIGHEST, for verification)."""
    N, F, _ = x.shape
    hp = jax.lax.Precision.HIGHEST
    h = jnp.einsum('nfj,fjk->nfk', x, w1, precision=hp) + b1[:, 0]
    h = _lrelu(h)
    for i in range(rw.shape[1]):
        h = _lrelu(jnp.einsum('nfj,fjk->nfk', h, rw[:, i], precision=hp)
                   + rb[:, i, 0] + ALPHA * h)
    logits = _lrelu(jnp.einsum('nfj,fjk->nfk', h, w2, precision=hp) + b2[:, 0])
    logits = logits * tau[:, 0]
    p = jax.nn.softmax(logits, axis=-1)
    out = jnp.einsum('nfb,fbd->nfd', p, emb, precision=hp)
    return out.reshape(N, F * emb.shape[-1])


def init_params(key, feature_num, bucket_num, bucket_dim, layer_conf):
    """Deterministic synthetic init matching the module's parameter shapes."""
    F, B, D = feature_num, bucket_num, bucket_dim
    L0 = layer_conf[0]
    ks = jax.random.split(key, 8)

    def kaiming_uniform(k, shape):
        fan_in = shape[1] * int(jnp.prod(jnp.array(shape[2:])))
        gain = jnp.sqrt(2.0)                      # leaky_relu, a=0
        bound = gain * jnp.sqrt(3.0 / fan_in)
        return jax.random.uniform(k, shape, jnp.float32, -bound, bound)

    w1 = kaiming_uniform(ks[0], (F, 3, L0))
    b1 = jax.random.normal(ks[1], (F, 1, L0), jnp.float32)
    rw = jnp.stack([kaiming_uniform(jax.random.fold_in(ks[2], i), (F, L, L))
                    for i, L in enumerate(layer_conf)], axis=1)       # (F, 3, L, L)
    rb = jnp.stack([jax.random.normal(jax.random.fold_in(ks[3], i), (F, 1, L),
                                      jnp.float32)
                    for i, L in enumerate(layer_conf)], axis=1)       # (F, 3, 1, L)
    w2 = kaiming_uniform(ks[4], (F, layer_conf[-1], B))
    b2 = jax.random.normal(ks[5], (F, 1, B), jnp.float32)
    tau = jnp.ones((F, 1, B), jnp.float32)
    emb = jax.random.normal(ks[6], (F, B, D), jnp.float32)
    return w1, b1, rw, rb, w2, b2, tau, emb


if __name__ == "__main__":
    feature_num = 4
    bucket_num = 8
    bucket_dim = 128
    layer_conf = [64, 64, 64]
    batch = 8

    key = jax.random.PRNGKey(0)
    k_x, k_p = jax.random.split(key)
    x = jax.random.normal(k_x, (batch, feature_num, 3), jnp.float32)
    params = init_params(k_p, feature_num, bucket_num, bucket_dim, layer_conf)

    out = autodis_forward(x, *params)
    out = jax.block_until_ready(out)

    ref = reference_forward(x, *params)
    assert out.shape == (batch, feature_num * bucket_dim), out.shape
    assert bool(jnp.all(jnp.isfinite(out)))
    # Kernel runs bf16 MXU operands (f32 accumulation) + approx reciprocal;
    # reference is HIGHEST-precision f32, hence the modest tolerance.
    assert bool(jnp.allclose(out, ref, rtol=2e-2, atol=2e-2)), "mismatch vs reference"

    print("KERNEL_OK")
</pallas_src>

<mosaic_0001>
module attributes {stable_mosaic.version = 11 : i64} {
  func.func @autodis_kernel(%arg0: i32, %arg1: memref<8x12xbf16, #tpu.memory_space<vmem>>, %arg2: memref<12x256xbf16, #tpu.memory_space<vmem>>, %arg3: memref<1x256xf32, #tpu.memory_space<vmem>>, %arg4: memref<3x256x256xbf16, #tpu.memory_space<vmem>>, %arg5: memref<3x1x256xf32, #tpu.memory_space<vmem>>, %arg6: memref<256x32xbf16, #tpu.memory_space<vmem>>, %arg7: memref<1x32xf32, #tpu.memory_space<vmem>>, %arg8: memref<1x32xf32, #tpu.memory_space<vmem>>, %arg9: memref<32x512xbf16, #tpu.memory_space<vmem>>, %arg10: memref<8x512xf32, #tpu.memory_space<vmem>>) attributes {dimension_semantics = [#tpu.dimension_semantics<parallel>], iteration_bounds = array<i64: 1>, scalar_prefetch = 0 : i64, scratch_operands = 0 : i64, tpu.core_type = #tpu.core_type<tc>, window_params = [{transform_indices = @transform_0, window_bounds = array<i64: 8, 12>}, {pipeline_mode = #tpu.pipeline_mode<synchronous>, transform_indices = @transform_1, window_bounds = array<i64: 12, 256>}, {pipeline_mode = #tpu.pipeline_mode<synchronous>, transform_indices = @transform_2, window_bounds = array<i64: 1, 256>}, {pipeline_mode = #tpu.pipeline_mode<synchronous>, transform_indices = @transform_3, window_bounds = array<i64: 3, 256, 256>}, {pipeline_mode = #tpu.pipeline_mode<synchronous>, transform_indices = @transform_4, window_bounds = array<i64: 3, 1, 256>}, {pipeline_mode = #tpu.pipeline_mode<synchronous>, transform_indices = @transform_5, window_bounds = array<i64: 256, 32>}, {pipeline_mode = #tpu.pipeline_mode<synchronous>, transform_indices = @transform_6, window_bounds = array<i64: 1, 32>}, {pipeline_mode = #tpu.pipeline_mode<synchronous>, transform_indices = @transform_7, window_bounds = array<i64: 1, 32>}, {pipeline_mode = #tpu.pipeline_mode<synchronous>, transform_indices = @transform_8, window_bounds = array<i64: 32, 512>}, {transform_indices = @transform_9, window_bounds = array<i64: 8, 512>}]} {
    %c0 = arith.constant 0 : index
    %c0_0 = arith.constant 0 : index
    %0 = vector.load %arg1[%c0, %c0_0] : memref<8x12xbf16, #tpu.memory_space<vmem>>, vector<8x12xbf16>
    %c0_1 = arith.constant 0 : index
    %c0_2 = arith.constant 0 : index
    %1 = vector.load %arg2[%c0_1, %c0_2] : memref<12x256xbf16, #tpu.memory_space<vmem>>, vector<12x256xbf16>
    %cst = arith.constant dense<0.000000e+00> : vector<8x256xf32>
    %2 = tpu.matmul %0, %1, %cst {dimension_numbers = #tpu.dot_dimension_numbers<[1], [0], [0], [1], [0, 0, 1, 1], [], []>} : vector<8x12xbf16>, vector<12x256xbf16>, vector<8x256xf32> -> vector<8x256xf32>
    %c0_3 = arith.constant 0 : index
    %c0_4 = arith.constant 0 : index
    %3 = vector.load %arg3[%c0_3, %c0_4] : memref<1x256xf32, #tpu.memory_space<vmem>>, vector<1x256xf32>
    %4 = vector.broadcast %3 : vector<1x256xf32> to vector<8x256xf32>
    %5 = arith.addf %2, %4 : vector<8x256xf32>
    %cst_5 = arith.constant 0.00999999977 : f32
    %6 = vector.broadcast %cst_5 : f32 to vector<8x256xf32>
    %7 = arith.mulf %6, %5 : vector<8x256xf32>
    %8 = arith.maximumf %5, %7 : vector<8x256xf32>
    %9 = arith.truncf %8 : vector<8x256xf32> to vector<8x256xbf16>
    %c0_6 = arith.constant 0 : index
    %c0_7 = arith.constant 0 : index
    %c0_8 = arith.constant 0 : index
    %10 = vector.load %arg4[%c0_6, %c0_7, %c0_8] : memref<3x256x256xbf16, #tpu.memory_space<vmem>>, vector<1x256x256xbf16>
    %11 = vector.shape_cast %10 : vector<1x256x256xbf16> to vector<256x256xbf16>
    %cst_9 = arith.constant dense<0.000000e+00> : vector<8x256xf32>
    %12 = tpu.matmul %9, %11, %cst_9 {dimension_numbers = #tpu.dot_dimension_numbers<[1], [0], [0], [1], [0, 0, 1, 1], [], []>} : vector<8x256xbf16>, vector<256x256xbf16>, vector<8x256xf32> -> vector<8x256xf32>
    %c0_10 = arith.constant 0 : index
    %c0_11 = arith.constant 0 : index
    %c0_12 = arith.constant 0 : index
    %13 = vector.load %arg5[%c0_10, %c0_11, %c0_12] : memref<3x1x256xf32, #tpu.memory_space<vmem>>, vector<1x1x256xf32>
    %14 = vector.shape_cast %13 : vector<1x1x256xf32> to vector<1x256xf32>
    %15 = vector.broadcast %14 : vector<1x256xf32> to vector<8x256xf32>
    %16 = arith.addf %12, %15 : vector<8x256xf32>
    %17 = arith.addf %16, %8 : vector<8x256xf32>
    %cst_13 = arith.constant 0.00999999977 : f32
    %18 = vector.broadcast %cst_13 : f32 to vector<8x256xf32>
    %19 = arith.mulf %18, %17 : vector<8x256xf32>
    %20 = arith.maximumf %17, %19 : vector<8x256xf32>
    %21 = arith.truncf %20 : vector<8x256xf32> to vector<8x256xbf16>
    %c1 = arith.constant 1 : index
    %c0_14 = arith.constant 0 : index
    %c0_15 = arith.constant 0 : index
    %22 = vector.load %arg4[%c1, %c0_14, %c0_15] : memref<3x256x256xbf16, #tpu.memory_space<vmem>>, vector<1x256x256xbf16>
    %23 = vector.shape_cast %22 : vector<1x256x256xbf16> to vector<256x256xbf16>
    %cst_16 = arith.constant dense<0.000000e+00> : vector<8x256xf32>
    %24 = tpu.matmul %21, %23, %cst_16 {dimension_numbers = #tpu.dot_dimension_numbers<[1], [0], [0], [1], [0, 0, 1, 1], [], []>} : vector<8x256xbf16>, vector<256x256xbf16>, vector<8x256xf32> -> vector<8x256xf32>
    %c1_17 = arith.constant 1 : index
    %c0_18 = arith.constant 0 : index
    %c0_19 = arith.constant 0 : index
    %25 = vector.load %arg5[%c1_17, %c0_18, %c0_19] : memref<3x1x256xf32, #tpu.memory_space<vmem>>, vector<1x1x256xf32>
    %26 = vector.shape_cast %25 : vector<1x1x256xf32> to vector<1x256xf32>
    %27 = vector.broadcast %26 : vector<1x256xf32> to vector<8x256xf32>
    %28 = arith.addf %24, %27 : vector<8x256xf32>
    %29 = arith.addf %28, %20 : vector<8x256xf32>
    %cst_20 = arith.constant 0.00999999977 : f32
    %30 = vector.broadcast %cst_20 : f32 to vector<8x256xf32>
    %31 = arith.mulf %30, %29 : vector<8x256xf32>
    %32 = arith.maximumf %29, %31 : vector<8x256xf32>
    %33 = arith.truncf %32 : vector<8x256xf32> to vector<8x256xbf16>
    %c2 = arith.constant 2 : index
    %c0_21 = arith.constant 0 : index
    %c0_22 = arith.constant 0 : index
    %34 = vector.load %arg4[%c2, %c0_21, %c0_22] : memref<3x256x256xbf16, #tpu.memory_space<vmem>>, vector<1x256x256xbf16>
    %35 = vector.shape_cast %34 : vector<1x256x256xbf16> to vector<256x256xbf16>
    %cst_23 = arith.constant dense<0.000000e+00> : vector<8x256xf32>
    %36 = tpu.matmul %33, %35, %cst_23 {dimension_numbers = #tpu.dot_dimension_numbers<[1], [0], [0], [1], [0, 0, 1, 1], [], []>} : vector<8x256xbf16>, vector<256x256xbf16>, vector<8x256xf32> -> vector<8x256xf32>
    %c2_24 = arith.constant 2 : index
    %c0_25 = arith.constant 0 : index
    %c0_26 = arith.constant 0 : index
    %37 = vector.load %arg5[%c2_24, %c0_25, %c0_26] : memref<3x1x256xf32, #tpu.memory_space<vmem>>, vector<1x1x256xf32>
    %38 = vector.shape_cast %37 : vector<1x1x256xf32> to vector<1x256xf32>
    %39 = vector.broadcast %38 : vector<1x256xf32> to vector<8x256xf32>
    %40 = arith.addf %36, %39 : vector<8x256xf32>
    %41 = arith.addf %40, %32 : vector<8x256xf32>
    %cst_27 = arith.constant 0.00999999977 : f32
    %42 = vector.broadcast %cst_27 : f32 to vector<8x256xf32>
    %43 = arith.mulf %42, %41 : vector<8x256xf32>
    %44 = arith.maximumf %41, %43 : vector<8x256xf32>
    %45 = arith.truncf %44 : vector<8x256xf32> to vector<8x256xbf16>
    %c0_28 = arith.constant 0 : index
    %c0_29 = arith.constant 0 : index
    %46 = vector.load %arg6[%c0_28, %c0_29] : memref<256x32xbf16, #tpu.memory_space<vmem>>, vector<256x32xbf16>
    %cst_30 = arith.constant dense<0.000000e+00> : vector<8x32xf32>
    %47 = tpu.matmul %45, %46, %cst_30 {dimension_numbers = #tpu.dot_dimension_numbers<[1], [0], [0], [1], [0, 0, 1, 1], [], []>} : vector<8x256xbf16>, vector<256x32xbf16>, vector<8x32xf32> -> vector<8x32xf32>
    %c0_31 = arith.constant 0 : index
    %c0_32 = arith.constant 0 : index
    %48 = vector.load %arg7[%c0_31, %c0_32] : memref<1x32xf32, #tpu.memory_space<vmem>>, vector<1x32xf32>
    %49 = vector.broadcast %48 : vector<1x32xf32> to vector<8x32xf32>
    %50 = arith.addf %47, %49 : vector<8x32xf32>
    %cst_33 = arith.constant 0.00999999977 : f32
    %51 = vector.broadcast %cst_33 : f32 to vector<8x32xf32>
    %52 = arith.mulf %51, %50 : vector<8x32xf32>
    %53 = arith.maximumf %50, %52 : vector<8x32xf32>
    %c0_34 = arith.constant 0 : index
    %c0_35 = arith.constant 0 : index
    %54 = vector.load %arg8[%c0_34, %c0_35] : memref<1x32xf32, #tpu.memory_space<vmem>>, vector<1x32xf32>
    %55 = vector.broadcast %54 : vector<1x32xf32> to vector<8x32xf32>
    %56 = arith.mulf %53, %55 : vector<8x32xf32>
    %57 = vector.extract_strided_slice %56 {offsets = [0, 0], sizes = [8, 8], strides = [1, 1]} : vector<8x32xf32> to vector<8x8xf32>
    %58 = vector.extract_strided_slice %56 {offsets = [0, 0], sizes = [8, 8], strides = [1, 1]} : vector<8x32xf32> to vector<8x8xf32>
    %cst_36 = arith.constant dense<0xFF800000> : vector<8xf32>
    %59 = vector.multi_reduction <maximumf>, %58, %cst_36 [1] : vector<8x8xf32> to vector<8xf32>
    %60 = vector.shape_cast %59 : vector<8xf32> to vector<8x1xf32>
    %61 = vector.broadcast %60 : vector<8x1xf32> to vector<8x8xf32>
    %62 = arith.subf %57, %61 : vector<8x8xf32>
    %63 = vector.extract_strided_slice %56 {offsets = [0, 8], sizes = [8, 8], strides = [1, 1]} : vector<8x32xf32> to vector<8x8xf32>
    %64 = vector.extract_strided_slice %56 {offsets = [0, 8], sizes = [8, 8], strides = [1, 1]} : vector<8x32xf32> to vector<8x8xf32>
    %cst_37 = arith.constant dense<0xFF800000> : vector<8xf32>
    %65 = vector.multi_reduction <maximumf>, %64, %cst_37 [1] : vector<8x8xf32> to vector<8xf32>
    %66 = vector.shape_cast %65 : vector<8xf32> to vector<8x1xf32>
    %67 = vector.broadcast %66 : vector<8x1xf32> to vector<8x8xf32>
    %68 = arith.subf %63, %67 : vector<8x8xf32>
    %69 = vector.extract_strided_slice %56 {offsets = [0, 16], sizes = [8, 8], strides = [1, 1]} : vector<8x32xf32> to vector<8x8xf32>
    %70 = vector.extract_strided_slice %56 {offsets = [0, 16], sizes = [8, 8], strides = [1, 1]} : vector<8x32xf32> to vector<8x8xf32>
    %cst_38 = arith.constant dense<0xFF800000> : vector<8xf32>
    %71 = vector.multi_reduction <maximumf>, %70, %cst_38 [1] : vector<8x8xf32> to vector<8xf32>
    %72 = vector.shape_cast %71 : vector<8xf32> to vector<8x1xf32>
    %73 = vector.broadcast %72 : vector<8x1xf32> to vector<8x8xf32>
    %74 = arith.subf %69, %73 : vector<8x8xf32>
    %75 = vector.extract_strided_slice %56 {offsets = [0, 24], sizes = [8, 8], strides = [1, 1]} : vector<8x32xf32> to vector<8x8xf32>
    %76 = vector.extract_strided_slice %56 {offsets = [0, 24], sizes = [8, 8], strides = [1, 1]} : vector<8x32xf32> to vector<8x8xf32>
    %cst_39 = arith.constant dense<0xFF800000> : vector<8xf32>
    %77 = vector.multi_reduction <maximumf>, %76, %cst_39 [1] : vector<8x8xf32> to vector<8xf32>
    %78 = vector.shape_cast %77 : vector<8xf32> to vector<8x1xf32>
    %79 = vector.broadcast %78 : vector<8x1xf32> to vector<8x8xf32>
    %80 = arith.subf %75, %79 : vector<8x8xf32>
    %81 = tpu.concatenate %62, %68, %74, %80 in 1 : vector<8x8xf32>, vector<8x8xf32>, vector<8x8xf32>, vector<8x8xf32> -> vector<8x32xf32>
    %82 = math.exp %81 : vector<8x32xf32>
    %83 = arith.truncf %82 : vector<8x32xf32> to vector<8x32xbf16>
    %c0_40 = arith.constant 0 : index
    %c0_41 = arith.constant 0 : index
    %84 = vector.load %arg9[%c0_40, %c0_41] : memref<32x512xbf16, #tpu.memory_space<vmem>>, vector<32x512xbf16>
    %cst_42 = arith.constant dense<0.000000e+00> : vector<8x512xf32>
    %85 = tpu.matmul %83, %84, %cst_42 {dimension_numbers = #tpu.dot_dimension_numbers<[1], [0], [0], [1], [0, 0, 1, 1], [], []>} : vector<8x32xbf16>, vector<32x512xbf16>, vector<8x512xf32> -> vector<8x512xf32>
    %86 = vector.extract_strided_slice %82 {offsets = [0, 0], sizes = [8, 8], strides = [1, 1]} : vector<8x32xf32> to vector<8x8xf32>
    %cst_43 = arith.constant dense<0.000000e+00> : vector<8xf32>
    %87 = vector.multi_reduction <add>, %86, %cst_43 [1] : vector<8x8xf32> to vector<8xf32>
    %88 = vector.shape_cast %87 : vector<8xf32> to vector<8x1xf32>
    %89 = vector.extract_strided_slice %85 {offsets = [0, 0], sizes = [8, 128], strides = [1, 1]} : vector<8x512xf32> to vector<8x128xf32>
    %90 = tpu.reciprocal %88 {approx = true} : vector<8x1xf32> -> vector<8x1xf32>
    %91 = vector.broadcast %90 : vector<8x1xf32> to vector<8x128xf32>
    %92 = arith.mulf %89, %91 : vector<8x128xf32>
    %c0_44 = arith.constant 0 : index
    %c0_45 = arith.constant 0 : index
    %93 = vector.load %arg10[%c0_44, %c0_45] : memref<8x512xf32, #tpu.memory_space<vmem>>, vector<8x128xf32>
    tpu.vector_store %arg10[%c0_44, %c0_45], %92 {strides = array<i32>} : memref<8x512xf32, #tpu.memory_space<vmem>>, vector<8x128xf32>,
    %94 = vector.extract_strided_slice %82 {offsets = [0, 8], sizes = [8, 8], strides = [1, 1]} : vector<8x32xf32> to vector<8x8xf32>
    %cst_46 = arith.constant dense<0.000000e+00> : vector<8xf32>
    %95 = vector.multi_reduction <add>, %94, %cst_46 [1] : vector<8x8xf32> to vector<8xf32>
    %96 = vector.shape_cast %95 : vector<8xf32> to vector<8x1xf32>
    %97 = vector.extract_strided_slice %85 {offsets = [0, 128], sizes = [8, 128], strides = [1, 1]} : vector<8x512xf32> to vector<8x128xf32>
    %98 = tpu.reciprocal %96 {approx = true} : vector<8x1xf32> -> vector<8x1xf32>
    %99 = vector.broadcast %98 : vector<8x1xf32> to vector<8x128xf32>
    %100 = arith.mulf %97, %99 : vector<8x128xf32>
    %c0_47 = arith.constant 0 : index
    %c128 = arith.constant 128 : index
    %101 = vector.load %arg10[%c0_47, %c128] : memref<8x512xf32, #tpu.memory_space<vmem>>, vector<8x128xf32>
    tpu.vector_store %arg10[%c0_47, %c128], %100 {strides = array<i32>} : memref<8x512xf32, #tpu.memory_space<vmem>>, vector<8x128xf32>,
    %102 = vector.extract_strided_slice %82 {offsets = [0, 16], sizes = [8, 8], strides = [1, 1]} : vector<8x32xf32> to vector<8x8xf32>
    %cst_48 = arith.constant dense<0.000000e+00> : vector<8xf32>
    %103 = vector.multi_reduction <add>, %102, %cst_48 [1] : vector<8x8xf32> to vector<8xf32>
    %104 = vector.shape_cast %103 : vector<8xf32> to vector<8x1xf32>
    %105 = vector.extract_strided_slice %85 {offsets = [0, 256], sizes = [8, 128], strides = [1, 1]} : vector<8x512xf32> to vector<8x128xf32>
    %106 = tpu.reciprocal %104 {approx = true} : vector<8x1xf32> -> vector<8x1xf32>
    %107 = vector.broadcast %106 : vector<8x1xf32> to vector<8x128xf32>
    %108 = arith.mulf %105, %107 : vector<8x128xf32>
    %c0_49 = arith.constant 0 : index
    %c256 = arith.constant 256 : index
    %109 = vector.load %arg10[%c0_49, %c256] : memref<8x512xf32, #tpu.memory_space<vmem>>, vector<8x128xf32>
    tpu.vector_store %arg10[%c0_49, %c256], %108 {strides = array<i32>} : memref<8x512xf32, #tpu.memory_space<vmem>>, vector<8x128xf32>,
    %110 = vector.extract_strided_slice %82 {offsets = [0, 24], sizes = [8, 8], strides = [1, 1]} : vector<8x32xf32> to vector<8x8xf32>
    %cst_50 = arith.constant dense<0.000000e+00> : vector<8xf32>
    %111 = vector.multi_reduction <add>, %110, %cst_50 [1] : vector<8x8xf32> to vector<8xf32>
    %112 = vector.shape_cast %111 : vector<8xf32> to vector<8x1xf32>
    %113 = vector.extract_strided_slice %85 {offsets = [0, 384], sizes = [8, 128], strides = [1, 1]} : vector<8x512xf32> to vector<8x128xf32>
    %114 = tpu.reciprocal %112 {approx = true} : vector<8x1xf32> -> vector<8x1xf32>
    %115 = vector.broadcast %114 : vector<8x1xf32> to vector<8x128xf32>
    %116 = arith.mulf %113, %115 : vector<8x128xf32>
    %c0_51 = arith.constant 0 : index
    %c384 = arith.constant 384 : index
    %117 = vector.load %arg10[%c0_51, %c384] : memref<8x512xf32, #tpu.memory_space<vmem>>, vector<8x128xf32>
    tpu.vector_store %arg10[%c0_51, %c384], %116 {strides = array<i32>} : memref<8x512xf32, #tpu.memory_space<vmem>>, vector<8x128xf32>,
    return
  }
  func.func @transform_0(%arg0: i32) -> (i32, i32) {
    %c0_i32 = arith.constant 0 : i32
    %c0_i32_0 = arith.constant 0 : i32
    return %arg0, %c0_i32 : i32, i32
  }
  func.func @transform_1(%arg0: i32) -> (i32, i32) {
    %c0_i32 = arith.constant 0 : i32
    %c0_i32_0 = arith.constant 0 : i32
    %c0_i32_1 = arith.constant 0 : i32
    return %c0_i32, %c0_i32_0 : i32, i32
  }
  func.func @transform_2(%arg0: i32) -> (i32, i32) {
    %c0_i32 = arith.constant 0 : i32
    %c0_i32_0 = arith.constant 0 : i32
    %c0_i32_1 = arith.constant 0 : i32
    return %c0_i32, %c0_i32_0 : i32, i32
  }
  func.func @transform_3(%arg0: i32) -> (i32, i32, i32) {
    %c0_i32 = arith.constant 0 : i32
    %c0_i32_0 = arith.constant 0 : i32
    %c0_i32_1 = arith.constant 0 : i32
    %c0_i32_2 = arith.constant 0 : i32
    return %c0_i32, %c0_i32_0, %c0_i32_1 : i32, i32, i32
  }
  func.func @transform_4(%arg0: i32) -> (i32, i32, i32) {
    %c0_i32 = arith.constant 0 : i32
    %c0_i32_0 = arith.constant 0 : i32
    %c0_i32_1 = arith.constant 0 : i32
    %c0_i32_2 = arith.constant 0 : i32
    return %c0_i32, %c0_i32_0, %c0_i32_1 : i32, i32, i32
  }
  func.func @transform_5(%arg0: i32) -> (i32, i32) {
    %c0_i32 = arith.constant 0 : i32
    %c0_i32_0 = arith.constant 0 : i32
    %c0_i32_1 = arith.constant 0 : i32
    return %c0_i32, %c0_i32_0 : i32, i32
  }
  func.func @transform_6(%arg0: i32) -> (i32, i32) {
    %c0_i32 = arith.constant 0 : i32
    %c0_i32_0 = arith.constant 0 : i32
    %c0_i32_1 = arith.constant 0 : i32
    return %c0_i32, %c0_i32_0 : i32, i32
  }
  func.func @transform_7(%arg0: i32) -> (i32, i32) {
    %c0_i32 = arith.constant 0 : i32
    %c0_i32_0 = arith.constant 0 : i32
    %c0_i32_1 = arith.constant 0 : i32
    return %c0_i32, %c0_i32_0 : i32, i32
  }
  func.func @transform_8(%arg0: i32) -> (i32, i32) {
    %c0_i32 = arith.constant 0 : i32
    %c0_i32_0 = arith.constant 0 : i32
    %c0_i32_1 = arith.constant 0 : i32
    return %c0_i32, %c0_i32_0 : i32, i32
  }
  func.func @transform_9(%arg0: i32) -> (i32, i32) {
    %c0_i32 = arith.constant 0 : i32
    %c0_i32_0 = arith.constant 0 : i32
    return %arg0, %c0_i32 : i32, i32
  }
}

</mosaic_0001>

<llo_original>
// kernel: squeeze.4
$region0: #{squeeze.4}
  %s0 = inlined_call_operand.vmem [shape: f32[4,64], index: 0, kind: input, shape index: {}]
  %s1 = inlined_call_operand.vmem [shape: f32[1,256], index: 1, kind: output, shape index: {}]
  $region1: #{squeeze.4} parent=0
    #allocation0 [shape = 'u8[8192]{0}', space=vmem, size = 0x2000, scoped, tag = 'scoped mem for output reshape']
    #allocation1 [shape = 'u8[4096]{0}', space=vmem, size = 0x1000, scoped, tag = 'scoped mem for input reshape']
    %s3 = sshllo.u32 0, 4
    %v4 = vld [vmem:[%s0] sm:%s3]
    %5 = vst [vmem:[#allocation1] sm:%s3] %v4
    %s6 = smov 3
    %v7 = vld [vmem:[#allocation1] ss:$2 sm:%s6]
    %vm8 = vcmask 523264
    %9 = vst.msk [vmem:[#allocation0] ss:$8 sm:$0x3] %vm8, %v7
    %s10 = scalar_lea.vmem [#allocation1], 1
    %s11 = smov 3
    %v12 = vld [vmem:[%s10] ss:$2 sm:%s11]
    %13 = vrot.lane.b32.xlu0 %v12, 64
    %v14 = vpop.permute.xlu0 %13
    %vm15 = vcmask 1048064
    %16 = vst.msk [vmem:[#allocation0] ss:$8 sm:$0x3] %vm15, %v14
    %s18 = sshllo.u32 0, 1
    %v20 = vld [vmem:[#allocation0] sm:%s18]
    %s21 = sshllo.u32 0, 1
    %22 = vst [vmem:[%s1] sm:%s21] %v20
    %s23 = scalar_lea.vmem [#allocation0], 8
    %v24 = vld [vmem:[%s23] sm:%s18]
    %s25 = sshllo.u32 0, 1
    %s26 = scalar_lea.vmem %s1, 1
    %27 = vst [vmem:[%s26] sm:%s25] %v24

// kernel: squeeze.6
$region0: #{squeeze.6}
  %s0 = inlined_call_operand.vmem [shape: f32[4,8], index: 0, kind: input, shape index: {}]
  %s1 = inlined_call_operand.vmem [shape: f32[1,32], index: 1, kind: output, shape index: {}]
  $region1: #{squeeze.6} parent=0
    #allocation0 [shape = 'u8[4096]{0}', space=vmem, size = 0x1000, scoped, tag = 'scoped mem for output reshape']
    #allocation1 [shape = 'u8[4096]{0}', space=vmem, size = 0x1000, scoped, tag = 'scoped mem for input reshape']
    %s3 = sshllo.u32 0, 4
    %v4 = vld [vmem:[%s0] sm:%s3]
    %5 = vst [vmem:[#allocation1] sm:%s3] %v4
    %v6 = vld [vmem:[#allocation1] sm:$0x1]
    %vm7 = vcmask 64512
    %8 = vst.msk [vmem:[#allocation0] sm:$0x1] %vm7, %v6
    %s9 = scalar_lea.vmem [#allocation1], 3
    %v10 = vld [vmem:[%s9] sm:$0x1]
    %11 = vrot.lane.b32.xlu0 %v10, 24
    %v12 = vpop.permute.xlu0 %11
    %vm13 = vcmask 261312
    %14 = vst.msk [vmem:[#allocation0] sm:$0x1] %vm13, %v12
    %s15 = scalar_lea.vmem [#allocation1], 2
    %v16 = vld [vmem:[%s15] sm:$0x1]
    %17 = vrot.lane.b32.xlu0 %v16, 16
    %v18 = vpop.permute.xlu0 %17
    %vm19 = vcmask 195712
    %20 = vst.msk [vmem:[#allocation0] sm:$0x1] %vm19, %v18
    %s21 = scalar_lea.vmem [#allocation1], 1
    %v22 = vld [vmem:[%s21] sm:$0x1]
    %23 = vrot.lane.b32.xlu0 %v22, 8
    %v24 = vpop.permute.xlu0 %23
    %vm25 = vcmask 130112
    %26 = vst.msk [vmem:[#allocation0] sm:$0x1] %vm25, %v24
    %s28 = sshllo.u32 0, 1
    %v30 = vld [vmem:[#allocation0] sm:%s28]
    %s31 = sshllo.u32 0, 1
    %32 = vst [vmem:[%s1] sm:%s31] %v30

// kernel: autodis_forward.1
$region0: #{autodis_forward.1}
  #allocation0 [shape = 'u32[]', space=smem, size = 0x4, offset = 0x4, fixed_abs, tag = 'smem constant byte address 0x4 - core index']
  #allocation1 [shape = 'u32[144,128]{1,0:T(1,128)}', space=vmem, size = 0x12000, scoped, tag = 'internal scratch']
  %s0 = inlined_call_operand.vmem [shape: bf16[8,12], index: 0, kind: input, shape index: {}]
  %s1 = inlined_call_operand.vmem [shape: bf16[12,256], index: 1, kind: input, shape index: {}]
  %s2 = inlined_call_operand.vmem [shape: f32[1,256], index: 2, kind: input, shape index: {}]
  %s3 = inlined_call_operand.vmem [shape: bf16[3,256,256], index: 3, kind: input, shape index: {}]
  %s4 = inlined_call_operand.vmem [shape: f32[3,1,256], index: 4, kind: input, shape index: {}]
  %s5 = inlined_call_operand.vmem [shape: bf16[256,32], index: 5, kind: input, shape index: {}]
  %s6 = inlined_call_operand.vmem [shape: f32[1,32], index: 6, kind: input, shape index: {}]
  %s7 = inlined_call_operand.vmem [shape: f32[1,32], index: 7, kind: input, shape index: {}]
  %s8 = inlined_call_operand.vmem [shape: bf16[32,512], index: 8, kind: input, shape index: {}]
  %s9 = inlined_call_operand.hbm [shape: f32[8,512], index: 9, kind: output, shape index: {}]
  %s10 = sld [smem:[#allocation0]]
  $region46: #{autodis_forward.1} parent=0
    _
  %s12 = ssub.s32 1, %s10
  %s13 = scalar_select 0, %s12, %s10
  $region1: #{autodis_forward.1} parent=0
    #allocation2 [shape = 'u8[16384]{0}', space=vmem, size = 0x4000, scoped, tag = 'output window, operand 0, single buffered']
    #allocation3 [shape = 's32[1]{0}', space=sflag, size = 0x4, scoped, tag = 'scoped memory for autodis_forward.1']
    %14 = vsyncpa [#allocation3], 0
    // Predicated region
    $region2: #{autodis_forward.1} parent=1 // pred_check
      _
    $region3: #{autodis_forward.1} parent=1 // pred_check_branch
      %16 = sbr.rel (0) target = $region5
    $region4: #{autodis_forward.1} parent=1 // pred_region
      _
    $region5: #{autodis_forward.1} parent=1 // pred_fallthru
      _
    // Predicated region
    $region6: #{autodis_forward.1} parent=1 // pred_check
      _
    $region7: #{autodis_forward.1} parent=1 // pred_check_branch
      %18 = sbr.rel (0) target = $region9
    $region8: #{autodis_forward.1} parent=1 // pred_region
      _
    $region9: #{autodis_forward.1} parent=1 // pred_fallthru
      _
    // Predicated region
    $region10: #{autodis_forward.1} parent=1 // pred_check
      _
    $region11: #{autodis_forward.1} parent=1 // pred_check_branch
      %20 = sbr.rel (0) target = $region13
    $region12: #{autodis_forward.1} parent=1 // pred_region
      _
    $region13: #{autodis_forward.1} parent=1 // pred_fallthru
      _
    // Predicated region
    $region14: #{autodis_forward.1} parent=1 // pred_check
      _
    $region15: #{autodis_forward.1} parent=1 // pred_check_branch
      %22 = sbr.rel (0) target = $region17
    $region16: #{autodis_forward.1} parent=1 // pred_region
      _
    $region17: #{autodis_forward.1} parent=1 // pred_fallthru
      _
    // Predicated region
    $region18: #{autodis_forward.1} parent=1 // pred_check
      _
    $region19: #{autodis_forward.1} parent=1 // pred_check_branch
      %24 = sbr.rel (0) target = $region21
    $region20: #{autodis_forward.1} parent=1 // pred_region
      _
    $region21: #{autodis_forward.1} parent=1 // pred_fallthru
      _
    // Predicated region
    $region22: #{autodis_forward.1} parent=1 // pred_check
      _
    $region23: #{autodis_forward.1} parent=1 // pred_check_branch
      %26 = sbr.rel (0) target = $region25
    $region24: #{autodis_forward.1} parent=1 // pred_region
      _
    $region25: #{autodis_forward.1} parent=1 // pred_fallthru
      _
    // Predicated region
    $region26: #{autodis_forward.1} parent=1 // pred_check
      _
    $region27: #{autodis_forward.1} parent=1 // pred_check_branch
      %28 = sbr.rel (0) target = $region29
    $region28: #{autodis_forward.1} parent=1 // pred_region
      _
    $region29: #{autodis_forward.1} parent=1 // pred_fallthru
      _
    // Predicated region
    $region30: #{autodis_forward.1} parent=1 // pred_check
      _
    $region31: #{autodis_forward.1} parent=1 // pred_check_branch
      %30 = sbr.rel (0) target = $region33
    $region32: #{autodis_forward.1} parent=1 // pred_region
      _
    $region33: #{autodis_forward.1} parent=1 // pred_fallthru
      _
    // Predicated region
    $region34: #{autodis_forward.1} parent=1 // pred_check
      _
    $region35: #{autodis_forward.1} parent=1 // pred_check_branch
      %32 = sbr.rel (0) target = $region37
    $region36: #{autodis_forward.1} parent=1 // pred_region
      _
    $region37: #{autodis_forward.1} parent=1 // pred_fallthru
      _
    %v34 = vld [vmem:[%s0] sm:$0xf]
    %v35 = vld [vmem:[%s1] sm:$0xff]
    %v36 = vld [vmem:[%s1 + $0x8] sm:$0x33]
    %v37 = vld [vmem:[%s2] sm:$0x3]
    %v39 = vlaneseq
    %v40 = vshrl.u32 %v39, 7
    %v41 = vsub.s32 0, %v40
    %v42 = vrot.slane %v37, %v41
    %v43 = vlaneseq
    %v44 = vshrl.u32 %v43, 7
    %v45 = vsub.s32 1, %v44
    %v46 = vrot.slane %v37, %v45
    %v51 = vunpack.c.l.b16 %v35
    %v52 = vunpack.c.h.b16 %v35
    %v53 = vunpack.c.l.b16 %v36
    %v54 = vunpack.c.h.b16 %v36
    %v55 = vpack.c.b16 %v53, %v51
    %v56 = vpack.c.b16 %v54, %v52
    %vm57 = vcmask 97280
    %v59 = vsel %vm57, %v34, 0
    %vm61 = vcmask 1045504
    %v63 = vsel %vm61, %v55, 0
    %v66 = vsel %vm61, %v56, 0
    %68 = vmatprep.subr.bf16.mxu0 %v66
    %69 = vmatpush1.bf16.msra.mxu0 %v63
    %70 = vmatprep.subr.bf16.mxu0 0
    %71 = vmatpush1.bf16.msra.mxu0 0
    %72 = vmatprep.subr.bf16.mxu0 0
    %73 = vmatpush1.bf16.msra.mxu0 0
    %74 = vmatprep.subr.bf16.mxu0 0
    %75 = vmatpush1.bf16.msra.mxu0 0
    %76 = vmatprep.subr.bf16.mxu0 0
    %77 = vmatpush1.bf16.msra.mxu0 0
    %78 = vmatprep.subr.bf16.mxu0 0
    %79 = vmatpush1.bf16.msra.mxu0 0
    %80 = vmatprep.subr.bf16.mxu0 0
    %81 = vmatpush1.bf16.msra.mxu0 0
    %82 = vmatprep.subr.bf16.mxu0 0
    %83 = vmatpush1.bf16.msra.mxu0 0
    %84 = vmatprep.subr.bf16.mxu0 0
    %85 = vmatpush1.bf16.msra.mxu0 0
    %86 = vmatprep.subr.bf16.mxu0 0
    %87 = vmatpush1.bf16.msra.mxu0 0
    %88 = vmatprep.subr.bf16.mxu0 0
    %89 = vmatpush1.bf16.msra.mxu0 0
    %90 = vmatprep.subr.bf16.mxu0 0
    %91 = vmatpush1.bf16.msra.mxu0 0
    %92 = vmatprep.subr.bf16.mxu0 0
    %93 = vmatpush1.bf16.msra.mxu0 0
    %94 = vmatprep.subr.bf16.mxu0 0
    %95 = vmatpush1.bf16.msra.mxu0 0
    %96 = vmatprep.subr.bf16.mxu0 0
    %97 = vmatpush1.bf16.msra.mxu0 0
    %98 = vmatprep.subr.bf16.mxu0 0
    %99 = vmatpush1.bf16.msra.mxu0 0
    %100 = vmatprep.mubr.bf16.mxu0 0
    %101 = vmatmul.mubr.bf16.gmra.mrb[0].mxu0 %v59
    %v102 = vpop.f32.mrb[0].mxu0
    %v103 = vadd.f32 %v42, %v102
    %v104 = vpop.f32.mrb[0].mxu0
    %v105 = vadd.f32 %v46, %v104
    %v106 = vpop.f32.mrb[0].mxu0
    %v107 = vpop.f32.mrb[0].mxu0
    %108 = vdwg.mxu0
    %v109 = vmul.f32 %v103, 0.01
    %v110 = vmul.f32 %v105, 0.01
    %v111 = vmax.f32 %v103, %v109
    %v112 = vmax.f32 %v105, %v110
    %v113 = vpack.c.bf16 %v111, %v111
    %v114 = vpack.c.bf16 %v112, %v112
    %v115 = vld [vmem:[%s3] sm:$0xff]
    %v116 = vld [vmem:[%s3 + $0x8] sm:$0xff]
    %v117 = vld [vmem:[%s3 + $0x10] sm:$0xff]
    %v118 = vld [vmem:[%s3 + $0x18] sm:$0xff]
    %v119 = vld [vmem:[%s3 + $0x20] sm:$0xff]
    %v120 = vld [vmem:[%s3 + $0x28] sm:$0xff]
    %v121 = vld [vmem:[%s3 + $0x30] sm:$0xff]
    %v122 = vld [vmem:[%s3 + $0x38] sm:$0xff]
    %v123 = vld [vmem:[%s3 + $0x40] sm:$0xff]
    %v124 = vld [vmem:[%s3 + $0x48] sm:$0xff]
    %v125 = vld [vmem:[%s3 + $0x50] sm:$0xff]
    %v126 = vld [vmem:[%s3 + $0x58] sm:$0xff]
    %v127 = vld [vmem:[%s3 + $0x60] sm:$0xff]
    %v128 = vld [vmem:[%s3 + $0x68] sm:$0xff]
    %v129 = vld [vmem:[%s3 + $0x70] sm:$0xff]
    %v130 = vld [vmem:[%s3 + $0x78] sm:$0xff]
    %v131 = vld [vmem:[%s3 + $0x80] sm:$0xff]
    %v132 = vld [vmem:[%s3 + $0x88] sm:$0xff]
    %v133 = vld [vmem:[%s3 + $0x90] sm:$0xff]
    %v134 = vld [vmem:[%s3 + $0x98] sm:$0xff]
    %v135 = vld [vmem:[%s3 + $0xa0] sm:$0xff]
    %v136 = vld [vmem:[%s3 + $0xa8] sm:$0xff]
    %v137 = vld [vmem:[%s3 + $0xb0] sm:$0xff]
    %v138 = vld [vmem:[%s3 + $0xb8] sm:$0xff]
    %v139 = vld [vmem:[%s3 + $0xc0] sm:$0xff]
    %v140 = vld [vmem:[%s3 + $0xc8] sm:$0xff]
    %v141 = vld [vmem:[%s3 + $0xd0] sm:$0xff]
    %v142 = vld [vmem:[%s3 + $0xd8] sm:$0xff]
    %v143 = vld [vmem:[%s3 + $0xe0] sm:$0xff]
    %v144 = vld [vmem:[%s3 + $0xe8] sm:$0xff]
    %v145 = vld [vmem:[%s3 + $0xf0] sm:$0xff]
    %v146 = vld [vmem:[%s3 + $0xf8] sm:$0xff]
    %v147 = vld [vmem:[%s4] sm:$0x3]
    %v149 = vlaneseq
    %v150 = vshrl.u32 %v149, 7
    %v151 = vsub.s32 0, %v150
    %v152 = vrot.slane %v147, %v151
    %v153 = vlaneseq
    %v154 = vshrl.u32 %v153, 7
    %v155 = vsub.s32 1, %v154
    %v156 = vrot.slane %v147, %v155
    %v191 = vunpack.c.l.b16 %v115
    %v192 = vunpack.c.h.b16 %v115
    %v193 = vunpack.c.l.b16 %v116
    %v194 = vunpack.c.h.b16 %v116
    %v195 = vunpack.c.l.b16 %v117
    %v196 = vunpack.c.h.b16 %v117
    %v197 = vunpack.c.l.b16 %v118
    %v198 = vunpack.c.h.b16 %v118
    %v199 = vunpack.c.l.b16 %v119
    %v200 = vunpack.c.h.b16 %v119
    %v201 = vunpack.c.l.b16 %v120
    %v202 = vunpack.c.h.b16 %v120
    %v203 = vunpack.c.l.b16 %v121
    %v204 = vunpack.c.h.b16 %v121
    %v205 = vunpack.c.l.b16 %v122
    %v206 = vunpack.c.h.b16 %v122
    %v207 = vunpack.c.l.b16 %v123
    %v208 = vunpack.c.h.b16 %v123
    %v209 = vunpack.c.l.b16 %v124
    %v210 = vunpack.c.h.b16 %v124
    %v211 = vunpack.c.l.b16 %v125
    %v212 = vunpack.c.h.b16 %v125
    %v213 = vunpack.c.l.b16 %v126
    %v214 = vunpack.c.h.b16 %v126
    %v215 = vunpack.c.l.b16 %v127
    %v216 = vunpack.c.h.b16 %v127
    %v217 = vunpack.c.l.b16 %v128
    %v218 = vunpack.c.h.b16 %v128
    %v219 = vunpack.c.l.b16 %v129
    %v220 = vunpack.c.h.b16 %v129
    %v221 = vunpack.c.l.b16 %v130
    %v222 = vunpack.c.h.b16 %v130
    %v223 = vunpack.c.l.b16 %v131
    %v224 = vunpack.c.h.b16 %v131
    %v225 = vunpack.c.l.b16 %v132
    %v226 = vunpack.c.h.b16 %v132
    %v227 = vunpack.c.l.b16 %v133
    %v228 = vunpack.c.h.b16 %v133
    %v229 = vunpack.c.l.b16 %v134
    %v230 = vunpack.c.h.b16 %v134
    %v231 = vunpack.c.l.b16 %v135
    %v232 = vunpack.c.h.b16 %v135
    %v233 = vunpack.c.l.b16 %v136
    %v234 = vunpack.c.h.b16 %v136
    %v235 = vunpack.c.l.b16 %v137
    %v236 = vunpack.c.h.b16 %v137
    %v237 = vunpack.c.l.b16 %v138
    %v238 = vunpack.c.h.b16 %v138
    %v239 = vunpack.c.l.b16 %v139
    %v240 = vunpack.c.h.b16 %v139
    %v241 = vunpack.c.l.b16 %v140
    %v242 = vunpack.c.h.b16 %v140
    %v243 = vunpack.c.l.b16 %v141
    %v244 = vunpack.c.h.b16 %v141
    %v245 = vunpack.c.l.b16 %v142
    %v246 = vunpack.c.h.b16 %v142
    %v247 = vunpack.c.l.b16 %v143
    %v248 = vunpack.c.h.b16 %v143
    %v249 = vunpack.c.l.b16 %v144
    %v250 = vunpack.c.h.b16 %v144
    %v251 = vunpack.c.l.b16 %v145
    %v252 = vunpack.c.h.b16 %v145
    %v253 = vunpack.c.l.b16 %v146
    %v254 = vunpack.c.h.b16 %v146
    %v255 = vpack.c.b16 %v193, %v191
    %v256 = vpack.c.b16 %v194, %v192
    %v257 = vpack.c.b16 %v197, %v195
    %v258 = vpack.c.b16 %v198, %v196
    %v259 = vpack.c.b16 %v201, %v199
    %v260 = vpack.c.b16 %v202, %v200
    %v261 = vpack.c.b16 %v205, %v203
    %v262 = vpack.c.b16 %v206, %v204
    %v263 = vpack.c.b16 %v209, %v207
    %v264 = vpack.c.b16 %v210, %v208
    %v265 = vpack.c.b16 %v213, %v211
    %v266 = vpack.c.b16 %v214, %v212
    %v267 = vpack.c.b16 %v217, %v215
    %v268 = vpack.c.b16 %v218, %v216
    %v269 = vpack.c.b16 %v221, %v219
    %v270 = vpack.c.b16 %v222, %v220
    %v271 = vpack.c.b16 %v225, %v223
    %v272 = vpack.c.b16 %v226, %v224
    %v273 = vpack.c.b16 %v229, %v227
    %v274 = vpack.c.b16 %v230, %v228
    %v275 = vpack.c.b16 %v233, %v231
    %v276 = vpack.c.b16 %v234, %v232
    %v277 = vpack.c.b16 %v237, %v235
    %v278 = vpack.c.b16 %v238, %v236
    %v279 = vpack.c.b16 %v241, %v239
    %v280 = vpack.c.b16 %v242, %v240
    %v281 = vpack.c.b16 %v245, %v243
    %v282 = vpack.c.b16 %v246, %v244
    %v283 = vpack.c.b16 %v249, %v247
    %v284 = vpack.c.b16 %v250, %v248
    %v285 = vpack.c.b16 %v253, %v251
    %v286 = vpack.c.b16 %v254, %v252
    %319 = vmatprep.subr.bf16.mxu0 %v256
    %320 = vmatpush1.bf16.msra.mxu0 %v255
    %321 = vmatprep.subr.bf16.mxu0 %v258
    %322 = vmatpush1.bf16.msra.mxu0 %v257
    %323 = vmatprep.subr.bf16.mxu0 %v260
    %324 = vmatpush1.bf16.msra.mxu0 %v259
    %325 = vmatprep.subr.bf16.mxu0 %v262
    %326 = vmatpush1.bf16.msra.mxu0 %v261
    %327 = vmatprep.subr.bf16.mxu0 %v264
    %328 = vmatpush1.bf16.msra.mxu0 %v263
    %329 = vmatprep.subr.bf16.mxu0 %v266
    %330 = vmatpush1.bf16.msra.mxu0 %v265
    %331 = vmatprep.subr.bf16.mxu0 %v268
    %332 = vmatpush1.bf16.msra.mxu0 %v267
    %333 = vmatprep.subr.bf16.mxu0 %v270
    %334 = vmatpush1.bf16.msra.mxu0 %v269
    %335 = vmatprep.subr.bf16.mxu0 %v272
    %336 = vmatpush1.bf16.msra.mxu0 %v271
    %337 = vmatprep.subr.bf16.mxu0 %v274
    %338 = vmatpush1.bf16.msra.mxu0 %v273
    %339 = vmatprep.subr.bf16.mxu0 %v276
    %340 = vmatpush1.bf16.msra.mxu0 %v275
    %341 = vmatprep.subr.bf16.mxu0 %v278
    %342 = vmatpush1.bf16.msra.mxu0 %v277
    %343 = vmatprep.subr.bf16.mxu0 %v280
    %344 = vmatpush1.bf16.msra.mxu0 %v279
    %345 = vmatprep.subr.bf16.mxu0 %v282
    %346 = vmatpush1.bf16.msra.mxu0 %v281
    %347 = vmatprep.subr.bf16.mxu0 %v284
    %348 = vmatpush1.bf16.msra.mxu0 %v283
    %349 = vmatprep.subr.bf16.mxu0 %v286
    %350 = vmatpush1.bf16.msra.mxu0 %v285
    %351 = vmatprep.mubr.bf16.mxu0 %v114
    %352 = vmatmul.mubr.bf16.gmra.mrb[0].mxu0 %v113
    %v353 = vpop.f32.mrb[0].mxu0
    %v354 = vadd.f32 %v152, %v353
    %v355 = vpop.f32.mrb[0].mxu0
    %v356 = vadd.f32 %v156, %v355
    %v357 = vpop.f32.mrb[0].mxu0
    %v358 = vpop.f32.mrb[0].mxu0
    %359 = vdwg.mxu0
    %v360 = vadd.f32 %v354, %v111
    %v361 = vadd.f32 %v356, %v112
    %v362 = vmul.f32 %v360, 0.01
    %v363 = vmul.f32 %v361, 0.01
    %v364 = vmax.f32 %v360, %v362
    %v365 = vmax.f32 %v361, %v363
    %v366 = vpack.c.bf16 %v364, %v364
    %v367 = vpack.c.bf16 %v365, %v365
    %s368 = scalar_lea.vmem %s3, 256
    %v369 = vld [vmem:[%s368] sm:$0xff]
    %v370 = vld [vmem:[%s368 + $0x8] sm:$0xff]
    %v371 = vld [vmem:[%s368 + $0x10] sm:$0xff]
    %v372 = vld [vmem:[%s368 + $0x18] sm:$0xff]
    %v373 = vld [vmem:[%s368 + $0x20] sm:$0xff]
    %v374 = vld [vmem:[%s368 + $0x28] sm:$0xff]
    %v375 = vld [vmem:[%s368 + $0x30] sm:$0xff]
    %v376 = vld [vmem:[%s368 + $0x38] sm:$0xff]
    %v377 = vld [vmem:[%s368 + $0x40] sm:$0xff]
    %v378 = vld [vmem:[%s368 + $0x48] sm:$0xff]
    %v379 = vld [vmem:[%s368 + $0x50] sm:$0xff]
    %v380 = vld [vmem:[%s368 + $0x58] sm:$0xff]
    %v381 = vld [vmem:[%s368 + $0x60] sm:$0xff]
    %v382 = vld [vmem:[%s368 + $0x68] sm:$0xff]
    %v383 = vld [vmem:[%s368 + $0x70] sm:$0xff]
    %v384 = vld [vmem:[%s368 + $0x78] sm:$0xff]
    %v385 = vld [vmem:[%s368 + $0x80] sm:$0xff]
    %v386 = vld [vmem:[%s368 + $0x88] sm:$0xff]
    %v387 = vld [vmem:[%s368 + $0x90] sm:$0xff]
    %v388 = vld [vmem:[%s368 + $0x98] sm:$0xff]
    %v389 = vld [vmem:[%s368 + $0xa0] sm:$0xff]
    %v390 = vld [vmem:[%s368 + $0xa8] sm:$0xff]
    %v391 = vld [vmem:[%s368 + $0xb0] sm:$0xff]
    %v392 = vld [vmem:[%s368 + $0xb8] sm:$0xff]
    %v393 = vld [vmem:[%s368 + $0xc0] sm:$0xff]
    %v394 = vld [vmem:[%s368 + $0xc8] sm:$0xff]
    %v395 = vld [vmem:[%s368 + $0xd0] sm:$0xff]
    %v396 = vld [vmem:[%s368 + $0xd8] sm:$0xff]
    %v397 = vld [vmem:[%s368 + $0xe0] sm:$0xff]
    %v398 = vld [vmem:[%s368 + $0xe8] sm:$0xff]
    %v399 = vld [vmem:[%s368 + $0xf0] sm:$0xff]
    %v400 = vld [vmem:[%s368 + $0xf8] sm:$0xff]
    %s401 = scalar_lea.vmem %s4, 2
    %v402 = vld [vmem:[%s401] sm:$0x3]
    %v404 = vlaneseq
    %v405 = vshrl.u32 %v404, 7
    %v406 = vsub.s32 0, %v405
    %v407 = vrot.slane %v402, %v406
    %v408 = vlaneseq
    %v409 = vshrl.u32 %v408, 7
    %v410 = vsub.s32 1, %v409
    %v411 = vrot.slane %v402, %v410
    %v446 = vunpack.c.l.b16 %v369
    %v447 = vunpack.c.h.b16 %v369
    %v448 = vunpack.c.l.b16 %v370
    %v449 = vunpack.c.h.b16 %v370
    %v450 = vunpack.c.l.b16 %v371
    %v451 = vunpack.c.h.b16 %v371
    %v452 = vunpack.c.l.b16 %v372
    %v453 = vunpack.c.h.b16 %v372
    %v454 = vunpack.c.l.b16 %v373
    %v455 = vunpack.c.h.b16 %v373
    %v456 = vunpack.c.l.b16 %v374
    %v457 = vunpack.c.h.b16 %v374
    %v458 = vunpack.c.l.b16 %v375
    %v459 = vunpack.c.h.b16 %v375
    %v460 = vunpack.c.l.b16 %v376
    %v461 = vunpack.c.h.b16 %v376
    %v462 = vunpack.c.l.b16 %v377
    %v463 = vunpack.c.h.b16 %v377
    %v464 = vunpack.c.l.b16 %v378
    %v465 = vunpack.c.h.b16 %v378
    %v466 = vunpack.c.l.b16 %v379
    %v467 = vunpack.c.h.b16 %v379
    %v468 = vunpack.c.l.b16 %v380
    %v469 = vunpack.c.h.b16 %v380
    %v470 = vunpack.c.l.b16 %v381
    %v471 = vunpack.c.h.b16 %v381
    %v472 = vunpack.c.l.b16 %v382
    %v473 = vunpack.c.h.b16 %v382
    %v474 = vunpack.c.l.b16 %v383
    %v475 = vunpack.c.h.b16 %v383
    %v476 = vunpack.c.l.b16 %v384
    %v477 = vunpack.c.h.b16 %v384
    %v478 = vunpack.c.l.b16 %v385
    %v479 = vunpack.c.h.b16 %v385
    %v480 = vunpack.c.l.b16 %v386
    %v481 = vunpack.c.h.b16 %v386
    %v482 = vunpack.c.l.b16 %v387
    %v483 = vunpack.c.h.b16 %v387
    %v484 = vunpack.c.l.b16 %v388
    %v485 = vunpack.c.h.b16 %v388
    %v486 = vunpack.c.l.b16 %v389
    %v487 = vunpack.c.h.b16 %v389
    %v488 = vunpack.c.l.b16 %v390
    %v489 = vunpack.c.h.b16 %v390
    %v490 = vunpack.c.l.b16 %v391
    %v491 = vunpack.c.h.b16 %v391
    %v492 = vunpack.c.l.b16 %v392
    %v493 = vunpack.c.h.b16 %v392
    %v494 = vunpack.c.l.b16 %v393
    %v495 = vunpack.c.h.b16 %v393
    %v496 = vunpack.c.l.b16 %v394
    %v497 = vunpack.c.h.b16 %v394
    %v498 = vunpack.c.l.b16 %v395
    %v499 = vunpack.c.h.b16 %v395
    %v500 = vunpack.c.l.b16 %v396
    %v501 = vunpack.c.h.b16 %v396
    %v502 = vunpack.c.l.b16 %v397
    %v503 = vunpack.c.h.b16 %v397
    %v504 = vunpack.c.l.b16 %v398
    %v505 = vunpack.c.h.b16 %v398
    %v506 = vunpack.c.l.b16 %v399
    %v507 = vunpack.c.h.b16 %v399
    %v508 = vunpack.c.l.b16 %v400
    %v509 = vunpack.c.h.b16 %v400
    %v510 = vpack.c.b16 %v448, %v446
    %v511 = vpack.c.b16 %v449, %v447
    %v512 = vpack.c.b16 %v452, %v450
    %v513 = vpack.c.b16 %v453, %v451
    %v514 = vpack.c.b16 %v456, %v454
    %v515 = vpack.c.b16 %v457, %v455
    %v516 = vpack.c.b16 %v460, %v458
    %v517 = vpack.c.b16 %v461, %v459
    %v518 = vpack.c.b16 %v464, %v462
    %v519 = vpack.c.b16 %v465, %v463
    %v520 = vpack.c.b16 %v468, %v466
    %v521 = vpack.c.b16 %v469, %v467
    %v522 = vpack.c.b16 %v472, %v470
    %v523 = vpack.c.b16 %v473, %v471
    %v524 = vpack.c.b16 %v476, %v474
    %v525 = vpack.c.b16 %v477, %v475
    %v526 = vpack.c.b16 %v480, %v478
    %v527 = vpack.c.b16 %v481, %v479
    %v528 = vpack.c.b16 %v484, %v482
    %v529 = vpack.c.b16 %v485, %v483
    %v530 = vpack.c.b16 %v488, %v486
    %v531 = vpack.c.b16 %v489, %v487
    %v532 = vpack.c.b16 %v492, %v490
    %v533 = vpack.c.b16 %v493, %v491
    %v534 = vpack.c.b16 %v496, %v494
    %v535 = vpack.c.b16 %v497, %v495
    %v536 = vpack.c.b16 %v500, %v498
    %v537 = vpack.c.b16 %v501, %v499
    %v538 = vpack.c.b16 %v504, %v502
    %v539 = vpack.c.b16 %v505, %v503
    %v540 = vpack.c.b16 %v508, %v506
    %v541 = vpack.c.b16 %v509, %v507
    %574 = vmatprep.subr.bf16.mxu0 %v511
    %575 = vmatpush1.bf16.msra.mxu0 %v510
    %576 = vmatprep.subr.bf16.mxu0 %v513
    %577 = vmatpush1.bf16.msra.mxu0 %v512
    %578 = vmatprep.subr.bf16.mxu0 %v515
    %579 = vmatpush1.bf16.msra.mxu0 %v514
    %580 = vmatprep.subr.bf16.mxu0 %v517
    %581 = vmatpush1.bf16.msra.mxu0 %v516
    %582 = vmatprep.subr.bf16.mxu0 %v519
    %583 = vmatpush1.bf16.msra.mxu0 %v518
    %584 = vmatprep.subr.bf16.mxu0 %v521
    %585 = vmatpush1.bf16.msra.mxu0 %v520
    %586 = vmatprep.subr.bf16.mxu0 %v523
    %587 = vmatpush1.bf16.msra.mxu0 %v522
    %588 = vmatprep.subr.bf16.mxu0 %v525
    %589 = vmatpush1.bf16.msra.mxu0 %v524
    %590 = vmatprep.subr.bf16.mxu0 %v527
    %591 = vmatpush1.bf16.msra.mxu0 %v526
    %592 = vmatprep.subr.bf16.mxu0 %v529
    %593 = vmatpush1.bf16.msra.mxu0 %v528
    %594 = vmatprep.subr.bf16.mxu0 %v531
    %595 = vmatpush1.bf16.msra.mxu0 %v530
    %596 = vmatprep.subr.bf16.mxu0 %v533
    %597 = vmatpush1.bf16.msra.mxu0 %v532
    %598 = vmatprep.subr.bf16.mxu0 %v535
    %599 = vmatpush1.bf16.msra.mxu0 %v534
    %600 = vmatprep.subr.bf16.mxu0 %v537
    %601 = vmatpush1.bf16.msra.mxu0 %v536
    %602 = vmatprep.subr.bf16.mxu0 %v539
    %603 = vmatpush1.bf16.msra.mxu0 %v538
    %604 = vmatprep.subr.bf16.mxu0 %v541
    %605 = vmatpush1.bf16.msra.mxu0 %v540
    %606 = vmatprep.mubr.bf16.mxu0 %v367
    %607 = vmatmul.mubr.bf16.gmra.mrb[0].mxu0 %v366
    %v608 = vpop.f32.mrb[0].mxu0
    %v609 = vadd.f32 %v407, %v608
    %v610 = vpop.f32.mrb[0].mxu0
    %v611 = vadd.f32 %v411, %v610
    %v612 = vpop.f32.mrb[0].mxu0
    %v613 = vpop.f32.mrb[0].mxu0
    %614 = vdwg.mxu0
    %v615 = vadd.f32 %v609, %v364
    %v616 = vadd.f32 %v611, %v365
    %v617 = vmul.f32 %v615, 0.01
    %v618 = vmul.f32 %v616, 0.01
    %v619 = vmax.f32 %v615, %v617
    %v620 = vmax.f32 %v616, %v618
    %v621 = vpack.c.bf16 %v619, %v619
    %v622 = vpack.c.bf16 %v620, %v620
    %s623 = scalar_lea.vmem %s3, 512
    %v624 = vld [vmem:[%s623] sm:$0xff]
    %v625 = vld [vmem:[%s623 + $0x8] sm:$0xff]
    %v626 = vld [vmem:[%s623 + $0x10] sm:$0xff]
    %v627 = vld [vmem:[%s623 + $0x18] sm:$0xff]
    %v628 = vld [vmem:[%s623 + $0x20] sm:$0xff]
    %v629 = vld [vmem:[%s623 + $0x28] sm:$0xff]
    %v630 = vld [vmem:[%s623 + $0x30] sm:$0xff]
    %v631 = vld [vmem:[%s623 + $0x38] sm:$0xff]
    %v632 = vld [vmem:[%s623 + $0x40] sm:$0xff]
    %v633 = vld [vmem:[%s623 + $0x48] sm:$0xff]
    %v634 = vld [vmem:[%s623 + $0x50] sm:$0xff]
    %v635 = vld [vmem:[%s623 + $0x58] sm:$0xff]
    %v636 = vld [vmem:[%s623 + $0x60] sm:$0xff]
    %v637 = vld [vmem:[%s623 + $0x68] sm:$0xff]
    %v638 = vld [vmem:[%s623 + $0x70] sm:$0xff]
    %v639 = vld [vmem:[%s623 + $0x78] sm:$0xff]
    %v640 = vld [vmem:[%s623 + $0x80] sm:$0xff]
    %v641 = vld [vmem:[%s623 + $0x88] sm:$0xff]
    %v642 = vld [vmem:[%s623 + $0x90] sm:$0xff]
    %v643 = vld [vmem:[%s623 + $0x98] sm:$0xff]
    %v644 = vld [vmem:[%s623 + $0xa0] sm:$0xff]
    %v645 = vld [vmem:[%s623 + $0xa8] sm:$0xff]
    %v646 = vld [vmem:[%s623 + $0xb0] sm:$0xff]
    %v647 = vld [vmem:[%s623 + $0xb8] sm:$0xff]
    %v648 = vld [vmem:[%s623 + $0xc0] sm:$0xff]
    %v649 = vld [vmem:[%s623 + $0xc8] sm:$0xff]
    %v650 = vld [vmem:[%s623 + $0xd0] sm:$0xff]
    %v651 = vld [vmem:[%s623 + $0xd8] sm:$0xff]
    %v652 = vld [vmem:[%s623 + $0xe0] sm:$0xff]
    %v653 = vld [vmem:[%s623 + $0xe8] sm:$0xff]
    %v654 = vld [vmem:[%s623 + $0xf0] sm:$0xff]
    %v655 = vld [vmem:[%s623 + $0xf8] sm:$0xff]
    %s656 = scalar_lea.vmem %s4, 4
    %v657 = vld [vmem:[%s656] sm:$0x3]
    %v659 = vlaneseq
    %v660 = vshrl.u32 %v659, 7
    %v661 = vsub.s32 0, %v660
    %v662 = vrot.slane %v657, %v661
    %v663 = vlaneseq
    %v664 = vshrl.u32 %v663, 7
    %v665 = vsub.s32 1, %v664
    %v666 = vrot.slane %v657, %v665
    %v701 = vunpack.c.l.b16 %v624
    %v702 = vunpack.c.h.b16 %v624
    %v703 = vunpack.c.l.b16 %v625
    %v704 = vunpack.c.h.b16 %v625
    %v705 = vunpack.c.l.b16 %v626
    %v706 = vunpack.c.h.b16 %v626
    %v707 = vunpack.c.l.b16 %v627
    %v708 = vunpack.c.h.b16 %v627
    %v709 = vunpack.c.l.b16 %v628
    %v710 = vunpack.c.h.b16 %v628
    %v711 = vunpack.c.l.b16 %v629
    %v712 = vunpack.c.h.b16 %v629
    %v713 = vunpack.c.l.b16 %v630
    %v714 = vunpack.c.h.b16 %v630
    %v715 = vunpack.c.l.b16 %v631
    %v716 = vunpack.c.h.b16 %v631
    %v717 = vunpack.c.l.b16 %v632
    %v718 = vunpack.c.h.b16 %v632
    %v719 = vunpack.c.l.b16 %v633
    %v720 = vunpack.c.h.b16 %v633
    %v721 = vunpack.c.l.b16 %v634
    %v722 = vunpack.c.h.b16 %v634
    %v723 = vunpack.c.l.b16 %v635
    %v724 = vunpack.c.h.b16 %v635
    %v725 = vunpack.c.l.b16 %v636
    %v726 = vunpack.c.h.b16 %v636
    %v727 = vunpack.c.l.b16 %v637
    %v728 = vunpack.c.h.b16 %v637
    %v729 = vunpack.c.l.b16 %v638
    %v730 = vunpack.c.h.b16 %v638
    %v731 = vunpack.c.l.b16 %v639
    %v732 = vunpack.c.h.b16 %v639
    %v733 = vunpack.c.l.b16 %v640
    %v734 = vunpack.c.h.b16 %v640
    %v735 = vunpack.c.l.b16 %v641
    %v736 = vunpack.c.h.b16 %v641
    %v737 = vunpack.c.l.b16 %v642
    %v738 = vunpack.c.h.b16 %v642
    %v739 = vunpack.c.l.b16 %v643
    %v740 = vunpack.c.h.b16 %v643
    %v741 = vunpack.c.l.b16 %v644
    %v742 = vunpack.c.h.b16 %v644
    %v743 = vunpack.c.l.b16 %v645
    %v744 = vunpack.c.h.b16 %v645
    %v745 = vunpack.c.l.b16 %v646
    %v746 = vunpack.c.h.b16 %v646
    %v747 = vunpack.c.l.b16 %v647
    %v748 = vunpack.c.h.b16 %v647
    %v749 = vunpack.c.l.b16 %v648
    %v750 = vunpack.c.h.b16 %v648
    %v751 = vunpack.c.l.b16 %v649
    %v752 = vunpack.c.h.b16 %v649
    %v753 = vunpack.c.l.b16 %v650
    %v754 = vunpack.c.h.b16 %v650
    %v755 = vunpack.c.l.b16 %v651
    %v756 = vunpack.c.h.b16 %v651
    %v757 = vunpack.c.l.b16 %v652
    %v758 = vunpack.c.h.b16 %v652
    %v759 = vunpack.c.l.b16 %v653
    %v760 = vunpack.c.h.b16 %v653
    %v761 = vunpack.c.l.b16 %v654
    %v762 = vunpack.c.h.b16 %v654
    %v763 = vunpack.c.l.b16 %v655
    %v764 = vunpack.c.h.b16 %v655
    %v765 = vpack.c.b16 %v703, %v701
    %v766 = vpack.c.b16 %v704, %v702
    %v767 = vpack.c.b16 %v707, %v705
    %v768 = vpack.c.b16 %v708, %v706
    %v769 = vpack.c.b16 %v711, %v709
    %v770 = vpack.c.b16 %v712, %v710
    %v771 = vpack.c.b16 %v715, %v713
    %v772 = vpack.c.b16 %v716, %v714
    %v773 = vpack.c.b16 %v719, %v717
    %v774 = vpack.c.b16 %v720, %v718
    %v775 = vpack.c.b16 %v723, %v721
    %v776 = vpack.c.b16 %v724, %v722
    %v777 = vpack.c.b16 %v727, %v725
    %v778 = vpack.c.b16 %v728, %v726
    %v779 = vpack.c.b16 %v731, %v729
    %v780 = vpack.c.b16 %v732, %v730
    %v781 = vpack.c.b16 %v735, %v733
    %v782 = vpack.c.b16 %v736, %v734
    %v783 = vpack.c.b16 %v739, %v737
    %v784 = vpack.c.b16 %v740, %v738
    %v785 = vpack.c.b16 %v743, %v741
    %v786 = vpack.c.b16 %v744, %v742
    %v787 = vpack.c.b16 %v747, %v745
    %v788 = vpack.c.b16 %v748, %v746
    %v789 = vpack.c.b16 %v751, %v749
    %v790 = vpack.c.b16 %v752, %v750
    %v791 = vpack.c.b16 %v755, %v753
    %v792 = vpack.c.b16 %v756, %v754
    %v793 = vpack.c.b16 %v759, %v757
    %v794 = vpack.c.b16 %v760, %v758
    %v795 = vpack.c.b16 %v763, %v761
    %v796 = vpack.c.b16 %v764, %v762
    %829 = vmatprep.subr.bf16.mxu0 %v766
    %830 = vmatpush1.bf16.msra.mxu0 %v765
    %831 = vmatprep.subr.bf16.mxu0 %v768
    %832 = vmatpush1.bf16.msra.mxu0 %v767
    %833 = vmatprep.subr.bf16.mxu0 %v770
    %834 = vmatpush1.bf16.msra.mxu0 %v769
    %835 = vmatprep.subr.bf16.mxu0 %v772
    %836 = vmatpush1.bf16.msra.mxu0 %v771
    %837 = vmatprep.subr.bf16.mxu0 %v774
    %838 = vmatpush1.bf16.msra.mxu0 %v773
    %839 = vmatprep.subr.bf16.mxu0 %v776
    %840 = vmatpush1.bf16.msra.mxu0 %v775
    %841 = vmatprep.subr.bf16.mxu0 %v778
    %842 = vmatpush1.bf16.msra.mxu0 %v777
    %843 = vmatprep.subr.bf16.mxu0 %v780
    %844 = vmatpush1.bf16.msra.mxu0 %v779
    %845 = vmatprep.subr.bf16.mxu0 %v782
    %846 = vmatpush1.bf16.msra.mxu0 %v781
    %847 = vmatprep.subr.bf16.mxu0 %v784
    %848 = vmatpush1.bf16.msra.mxu0 %v783
    %849 = vmatprep.subr.bf16.mxu0 %v786
    %850 = vmatpush1.bf16.msra.mxu0 %v785
    %851 = vmatprep.subr.bf16.mxu0 %v788
    %852 = vmatpush1.bf16.msra.mxu0 %v787
    %853 = vmatprep.subr.bf16.mxu0 %v790
    %854 = vmatpush1.bf16.msra.mxu0 %v789
    %855 = vmatprep.subr.bf16.mxu0 %v792
    %856 = vmatpush1.bf16.msra.mxu0 %v791
    %857 = vmatprep.subr.bf16.mxu0 %v794
    %858 = vmatpush1.bf16.msra.mxu0 %v793
    %859 = vmatprep.subr.bf16.mxu0 %v796
    %860 = vmatpush1.bf16.msra.mxu0 %v795
    %861 = vmatprep.mubr.bf16.mxu0 %v622
    %862 = vmatmul.mubr.bf16.gmra.mrb[0].mxu0 %v621
    %v863 = vpop.f32.mrb[0].mxu0
    %v864 = vadd.f32 %v662, %v863
    %v865 = vpop.f32.mrb[0].mxu0
    %v866 = vadd.f32 %v666, %v865
    %v867 = vpop.f32.mrb[0].mxu0
    %v868 = vpop.f32.mrb[0].mxu0
    %869 = vdwg.mxu0
    %v870 = vadd.f32 %v864, %v619
    %v871 = vadd.f32 %v866, %v620
    %v872 = vmul.f32 %v870, 0.01
    %v873 = vmul.f32 %v871, 0.01
    %v874 = vmax.f32 %v870, %v872
    %v875 = vmax.f32 %v871, %v873
    %v876 = vpack.c.bf16 %v874, %v874
    %v877 = vpack.c.bf16 %v875, %v875
    %v878 = vld [vmem:[%s5] sm:$0xf]
    %v879 = vld [vmem:[%s5 + $0x4] sm:$0xf]
    %v880 = vld [vmem:[%s5 + $0x8] sm:$0xf]
    %v881 = vld [vmem:[%s5 + $0xc] sm:$0xf]
    %v882 = vld [vmem:[%s5 + $0x10] sm:$0xf]
    %v883 = vld [vmem:[%s5 + $0x14] sm:$0xf]
    %v884 = vld [vmem:[%s5 + $0x18] sm:$0xf]
    %v885 = vld [vmem:[%s5 + $0x1c] sm:$0xf]
    %v886 = vld [vmem:[%s5 + $0x20] sm:$0xf]
    %v887 = vld [vmem:[%s5 + $0x24] sm:$0xf]
    %v888 = vld [vmem:[%s5 + $0x28] sm:$0xf]
    %v889 = vld [vmem:[%s5 + $0x2c] sm:$0xf]
    %v890 = vld [vmem:[%s5 + $0x30] sm:$0xf]
    %v891 = vld [vmem:[%s5 + $0x34] sm:$0xf]
    %v892 = vld [vmem:[%s5 + $0x38] sm:$0xf]
    %v893 = vld [vmem:[%s5 + $0x3c] sm:$0xf]
    %v894 = vld [vmem:[%s5 + $0x40] sm:$0xf]
    %v895 = vld [vmem:[%s5 + $0x44] sm:$0xf]
    %v896 = vld [vmem:[%s5 + $0x48] sm:$0xf]
    %v897 = vld [vmem:[%s5 + $0x4c] sm:$0xf]
    %v898 = vld [vmem:[%s5 + $0x50] sm:$0xf]
    %v899 = vld [vmem:[%s5 + $0x54] sm:$0xf]
    %v900 = vld [vmem:[%s5 + $0x58] sm:$0xf]
    %v901 = vld [vmem:[%s5 + $0x5c] sm:$0xf]
    %v902 = vld [vmem:[%s5 + $0x60] sm:$0xf]
    %v903 = vld [vmem:[%s5 + $0x64] sm:$0xf]
    %v904 = vld [vmem:[%s5 + $0x68] sm:$0xf]
    %v905 = vld [vmem:[%s5 + $0x6c] sm:$0xf]
    %v906 = vld [vmem:[%s5 + $0x70] sm:$0xf]
    %v907 = vld [vmem:[%s5 + $0x74] sm:$0xf]
    %v908 = vld [vmem:[%s5 + $0x78] sm:$0xf]
    %v909 = vld [vmem:[%s5 + $0x7c] sm:$0xf]
    %v910 = vld [vmem:[%s6] sm:$0x1]
    %v912 = vlaneseq
    %v913 = vshrl.u32 %v912, 7
    %v914 = vsub.s32 0, %v913
    %v915 = vrot.slane %v910, %v914
    %v949 = vunpack.c.l.b16 %v878
    %v950 = vunpack.c.l.b16 %v879
    %v951 = vunpack.c.l.b16 %v880
    %v952 = vunpack.c.l.b16 %v881
    %v953 = vunpack.c.l.b16 %v882
    %v954 = vunpack.c.l.b16 %v883
    %v955 = vunpack.c.l.b16 %v884
    %v956 = vunpack.c.l.b16 %v885
    %v957 = vunpack.c.l.b16 %v886
    %v958 = vunpack.c.l.b16 %v887
    %v959 = vunpack.c.l.b16 %v888
    %v960 = vunpack.c.l.b16 %v889
    %v961 = vunpack.c.l.b16 %v890
    %v962 = vunpack.c.l.b16 %v891
    %v963 = vunpack.c.l.b16 %v892
    %v964 = vunpack.c.l.b16 %v893
    %v965 = vunpack.c.l.b16 %v894
    %v966 = vunpack.c.l.b16 %v895
    %v967 = vunpack.c.l.b16 %v896
    %v968 = vunpack.c.l.b16 %v897
    %v969 = vunpack.c.l.b16 %v898
    %v970 = vunpack.c.l.b16 %v899
    %v971 = vunpack.c.l.b16 %v900
    %v972 = vunpack.c.l.b16 %v901
    %v973 = vunpack.c.l.b16 %v902
    %v974 = vunpack.c.l.b16 %v903
    %v975 = vunpack.c.l.b16 %v904
    %v976 = vunpack.c.l.b16 %v905
    %v977 = vunpack.c.l.b16 %v906
    %v978 = vunpack.c.l.b16 %v907
    %v979 = vunpack.c.l.b16 %v908
    %v980 = vunpack.c.l.b16 %v909
    %v981 = vpack.c.b16 %v950, %v949
    %v982 = vpack.c.b16 %v952, %v951
    %v983 = vpack.c.b16 %v954, %v953
    %v984 = vpack.c.b16 %v956, %v955
    %v985 = vpack.c.b16 %v958, %v957
    %v986 = vpack.c.b16 %v960, %v959
    %v987 = vpack.c.b16 %v962, %v961
    %v988 = vpack.c.b16 %v964, %v963
    %v989 = vpack.c.b16 %v966, %v965
    %v990 = vpack.c.b16 %v968, %v967
    %v991 = vpack.c.b16 %v970, %v969
    %v992 = vpack.c.b16 %v972, %v971
    %v993 = vpack.c.b16 %v974, %v973
    %v994 = vpack.c.b16 %v976, %v975
    %v995 = vpack.c.b16 %v978, %v977
    %v996 = vpack.c.b16 %v980, %v979
    %1013 = vmatprep.subr.bf16.mxu0 0
    %1014 = vmatpush1.bf16.msra.mxu0 %v981
    %1015 = vmatprep.subr.bf16.mxu0 0
    %1016 = vmatpush1.bf16.msra.mxu0 %v982
    %1017 = vmatprep.subr.bf16.mxu0 0
    %1018 = vmatpush1.bf16.msra.mxu0 %v983
    %1019 = vmatprep.subr.bf16.mxu0 0
    %1020 = vmatpush1.bf16.msra.mxu0 %v984
    %1021 = vmatprep.subr.bf16.mxu0 0
    %1022 = vmatpush1.bf16.msra.mxu0 %v985
    %1023 = vmatprep.subr.bf16.mxu0 0
    %1024 = vmatpush1.bf16.msra.mxu0 %v986
    %1025 = vmatprep.subr.bf16.mxu0 0
    %1026 = vmatpush1.bf16.msra.mxu0 %v987
    %1027 = vmatprep.subr.bf16.mxu0 0
    %1028 = vmatpush1.bf16.msra.mxu0 %v988
    %1029 = vmatprep.subr.bf16.mxu0 0
    %1030 = vmatpush1.bf16.msra.mxu0 %v989
    %1031 = vmatprep.subr.bf16.mxu0 0
    %1032 = vmatpush1.bf16.msra.mxu0 %v990
    %1033 = vmatprep.subr.bf16.mxu0 0
    %1034 = vmatpush1.bf16.msra.mxu0 %v991
    %1035 = vmatprep.subr.bf16.mxu0 0
    %1036 = vmatpush1.bf16.msra.mxu0 %v992
    %1037 = vmatprep.subr.bf16.mxu0 0
    %1038 = vmatpush1.bf16.msra.mxu0 %v993
    %1039 = vmatprep.subr.bf16.mxu0 0
    %1040 = vmatpush1.bf16.msra.mxu0 %v994
    %1041 = vmatprep.subr.bf16.mxu0 0
    %1042 = vmatpush1.bf16.msra.mxu0 %v995
    %1043 = vmatprep.subr.bf16.mxu0 0
    %1044 = vmatpush1.bf16.msra.mxu0 %v996
    %1045 = vmatprep.mubr.bf16.mxu0 %v877
    %1046 = vmatmul.mubr.bf16.gmra.mrb[0].mxu0 %v876
    %v1047 = vpop.f32.mrb[0].mxu0
    %v1048 = vadd.f32 %v915, %v1047
    %v1049 = vpop.f32.mrb[0].mxu0
    %v1050 = vpop.f32.mrb[0].mxu0
    %v1051 = vpop.f32.mrb[0].mxu0
    %1052 = vdwg.mxu0
    %v1053 = vmul.f32 %v1048, 0.01
    %v1054 = vmax.f32 %v1048, %v1053
    %v1055 = vld [vmem:[%s7] sm:$0x1]
    %v1057 = vlaneseq
    %v1058 = vshrl.u32 %v1057, 7
    %v1059 = vsub.s32 0, %v1058
    %v1060 = vrot.slane %v1055, %v1059
    %v1062 = vmul.f32 %v1054, %v1060
    %vm1063 = vcmask 64512
    %v1064 = vsel %vm1063, %v1062, -inf
    %1065 = vmax.xlane.f32.xlu0 %v1064
    %v1066 = vpop.xlane.xlu0 %1065
    %v1067 = vsub.f32 %v1062, %v1066
    %vm1068 = vcmask 130112
    %v1069 = vsel %vm1068, %v1062, -inf
    %1070 = vmax.xlane.f32.xlu0 %v1069
    %v1071 = vpop.xlane.xlu0 %1070
    %v1072 = vsub.f32 %v1062, %v1071
    %vm1073 = vcmask 195712
    %v1074 = vsel %vm1073, %v1062, -inf
    %1075 = vmax.xlane.f32.xlu0 %v1074
    %v1076 = vpop.xlane.xlu0 %1075
    %v1077 = vsub.f32 %v1062, %v1076
    %vm1078 = vcmask 261312
    %v1079 = vsel %vm1078, %v1062, -inf
    %1080 = vmax.xlane.f32.xlu0 %v1079
    %v1081 = vpop.xlane.xlu0 %1080
    %v1082 = vsub.f32 %v1062, %v1081
    %v1083 = vsel %vm1063, %v1067, %v1072
    %vm1084 = vcmask 130048
    %v1085 = vsel %vm1084, %v1083, %v1077
    %vm1086 = vcmask 195584
    %v1087 = vsel %vm1086, %v1085, %v1082
    %v1088 = vmul.f32 %v1087, 1.442695
    %v1089 = vpow.pop %v1088
    %v1090 = vpack.c.bf16 %v1089, %v1089
    %v1091 = vld [vmem:[%s8] sm:$0xff]
    %v1092 = vld [vmem:[%s8 + $0x8] sm:$0xff]
    %v1093 = vld [vmem:[%s8 + $0x10] sm:$0xff]
    %v1094 = vld [vmem:[%s8 + $0x18] sm:$0xff]
    %v1095 = vld [vmem:[%s8 + $0x20] sm:$0xff]
    %v1096 = vld [vmem:[%s8 + $0x28] sm:$0xff]
    %v1097 = vld [vmem:[%s8 + $0x30] sm:$0xff]
    %v1098 = vld [vmem:[%s8 + $0x38] sm:$0xff]
    %v1107 = vunpack.c.l.b16 %v1091
    %v1108 = vunpack.c.h.b16 %v1091
    %v1109 = vunpack.c.l.b16 %v1092
    %v1110 = vunpack.c.h.b16 %v1092
    %v1111 = vunpack.c.l.b16 %v1093
    %v1112 = vunpack.c.h.b16 %v1093
    %v1113 = vunpack.c.l.b16 %v1094
    %v1114 = vunpack.c.h.b16 %v1094
    %v1115 = vunpack.c.l.b16 %v1095
    %v1116 = vunpack.c.h.b16 %v1095
    %v1117 = vunpack.c.l.b16 %v1096
    %v1118 = vunpack.c.h.b16 %v1096
    %v1119 = vunpack.c.l.b16 %v1097
    %v1120 = vunpack.c.h.b16 %v1097
    %v1121 = vunpack.c.l.b16 %v1098
    %v1122 = vunpack.c.h.b16 %v1098
    %v1123 = vpack.c.b16 %v1111, %v1107
    %v1124 = vpack.c.b16 %v1112, %v1108
    %v1125 = vpack.c.b16 %v1113, %v1109
    %v1126 = vpack.c.b16 %v1114, %v1110
    %v1127 = vpack.c.b16 %v1119, %v1115
    %v1128 = vpack.c.b16 %v1120, %v1116
    %v1129 = vpack.c.b16 %v1121, %v1117
    %v1130 = vpack.c.b16 %v1122, %v1118
    %vm1139 = vcmask 261120
    %v1141 = vsel %vm1139, %v1090, 0
    %1143 = vmatprep.subr.bf16.mxu0 %v1124
    %1144 = vmatpush1.bf16.msra.mxu0 %v1123
    %1145 = vmatprep.subr.bf16.mxu0 %v1128
    %1146 = vmatpush1.bf16.msra.mxu0 %v1127
    %1147 = vmatprep.subr.bf16.mxu0 0
    %1148 = vmatpush1.bf16.msra.mxu0 0
    %1149 = vmatprep.subr.bf16.mxu0 0
    %1150 = vmatpush1.bf16.msra.mxu0 0
    %1151 = vmatprep.subr.bf16.mxu0 0
    %1152 = vmatpush1.bf16.msra.mxu0 0
    %1153 = vmatprep.subr.bf16.mxu0 0
    %1154 = vmatpush1.bf16.msra.mxu0 0
    %1155 = vmatprep.subr.bf16.mxu0 0
    %1156 = vmatpush1.bf16.msra.mxu0 0
    %1157 = vmatprep.subr.bf16.mxu0 0
    %1158 = vmatpush1.bf16.msra.mxu0 0
    %1159 = vmatprep.subr.bf16.mxu0 0
    %1160 = vmatpush1.bf16.msra.mxu0 0
    %1161 = vmatprep.subr.bf16.mxu0 0
    %1162 = vmatpush1.bf16.msra.mxu0 0
    %1163 = vmatprep.subr.bf16.mxu0 0
    %1164 = vmatpush1.bf16.msra.mxu0 0
    %1165 = vmatprep.subr.bf16.mxu0 0
    %1166 = vmatpush1.bf16.msra.mxu0 0
    %1167 = vmatprep.subr.bf16.mxu0 0
    %1168 = vmatpush1.bf16.msra.mxu0 0
    %1169 = vmatprep.subr.bf16.mxu0 0
    %1170 = vmatpush1.bf16.msra.mxu0 0
    %1171 = vmatprep.subr.bf16.mxu0 0
    %1172 = vmatpush1.bf16.msra.mxu0 0
    %1173 = vmatprep.subr.bf16.mxu0 0
    %1174 = vmatpush1.bf16.msra.mxu0 0
    %1175 = vmatprep.mubr.bf16.mxu0 0
    %1176 = vmatmul.mubr.bf16.gmra.mrb[0].mxu0 %v1141
    %v1177 = vpop.f32.mrb[0].mxu0
    %v1178 = vadd.f32 0.0, %v1177
    %v1179 = vpop.f32.mrb[0].mxu0
    %v1180 = vadd.f32 0.0, %v1179
    %v1181 = vpop.f32.mrb[0].mxu0
    %v1182 = vpop.f32.mrb[0].mxu0
    %1183 = vdwg.mxu0
    %1184 = vmatprep.subr.bf16.mxu0 %v1126
    %1185 = vmatpush1.bf16.msra.mxu0 %v1125
    %1186 = vmatprep.subr.bf16.mxu0 %v1130
    %1187 = vmatpush1.bf16.msra.mxu0 %v1129
    %1188 = vmatprep.subr.bf16.mxu0 0
    %1189 = vmatpush1.bf16.msra.mxu0 0
    %1190 = vmatprep.subr.bf16.mxu0 0
    %1191 = vmatpush1.bf16.msra.mxu0 0
    %1192 = vmatprep.subr.bf16.mxu0 0
    %1193 = vmatpush1.bf16.msra.mxu0 0
    %1194 = vmatprep.subr.bf16.mxu0 0
    %1195 = vmatpush1.bf16.msra.mxu0 0
    %1196 = vmatprep.subr.bf16.mxu0 0
    %1197 = vmatpush1.bf16.msra.mxu0 0
    %1198 = vmatprep.subr.bf16.mxu0 0
    %1199 = vmatpush1.bf16.msra.mxu0 0
    %1200 = vmatprep.subr.bf16.mxu0 0
    %1201 = vmatpush1.bf16.msra.mxu0 0
    %1202 = vmatprep.subr.bf16.mxu0 0
    %1203 = vmatpush1.bf16.msra.mxu0 0
    %1204 = vmatprep.subr.bf16.mxu0 0
    %1205 = vmatpush1.bf16.msra.mxu0 0
    %1206 = vmatprep.subr.bf16.mxu0 0
    %1207 = vmatpush1.bf16.msra.mxu0 0
    %1208 = vmatprep.subr.bf16.mxu0 0
    %1209 = vmatpush1.bf16.msra.mxu0 0
    %1210 = vmatprep.subr.bf16.mxu0 0
    %1211 = vmatpush1.bf16.msra.mxu0 0
    %1212 = vmatprep.subr.bf16.mxu0 0
    %1213 = vmatpush1.bf16.msra.mxu0 0
    %1214 = vmatprep.subr.bf16.mxu0 0
    %1215 = vmatpush1.bf16.msra.mxu0 0
    %1216 = vmatprep.mubr.bf16.mxu0 0
    %1217 = vmatmul.mubr.bf16.gmra.mrb[0].mxu0 %v1141
    %v1218 = vpop.f32.mrb[0].mxu0
    %v1219 = vadd.f32 0.0, %v1218
    %v1220 = vpop.f32.mrb[0].mxu0
    %v1221 = vadd.f32 0.0, %v1220
    %v1222 = vpop.f32.mrb[0].mxu0
    %v1223 = vpop.f32.mrb[0].mxu0
    %1224 = vdwg.mxu0
    %v1225 = vsel %vm1063, %v1089, 0.0
    %1226 = vadd.xlane.f32.xlu0 %v1225
    %v1227 = vpop.xlane.xlu0 %1226
    %v1228 = vrcp.pop %v1227
    %v1229 = vmul.f32 %v1178, %v1228
    %1230 = vst [vmem:[#allocation2] sm:$0xff] %v1229
    %1232 = vrot.lane.b32.xlu0 %v1089, 120
    %v1233 = vpop.permute.xlu0 %1232
    %v1235 = vsel %vm1063, %v1233, 0.0
    %1236 = vadd.xlane.f32.xlu0 %v1235
    %v1237 = vpop.xlane.xlu0 %1236
    %v1238 = vrcp.pop %v1237
    %v1239 = vmul.f32 %v1180, %v1238
    %1240 = vst [vmem:[#allocation2 + $0x8] sm:$0xff] %v1239
    %1241 = vrot.lane.b32.xlu0 %v1089, 112
    %v1242 = vpop.permute.xlu0 %1241
    %v1244 = vsel %vm1063, %v1242, 0.0
    %1245 = vadd.xlane.f32.xlu0 %v1244
    %v1246 = vpop.xlane.xlu0 %1245
    %v1247 = vrcp.pop %v1246
    %v1248 = vmul.f32 %v1219, %v1247
    %1249 = vst [vmem:[#allocation2 + $0x10] sm:$0xff] %v1248
    %1250 = vrot.lane.b32.xlu0 %v1089, 104
    %v1251 = vpop.permute.xlu0 %1250
    %v1253 = vsel %vm1063, %v1251, 0.0
    %1254 = vadd.xlane.f32.xlu0 %v1253
    %v1255 = vpop.xlane.xlu0 %1254
    %v1256 = vrcp.pop %v1255
    %v1257 = vmul.f32 %v1221, %v1256
    %1258 = vst [vmem:[#allocation2 + $0x18] sm:$0xff] %v1257
    // Predicated region
    $region38: #{autodis_forward.1} parent=1 // pred_check
      _
    $region39: #{autodis_forward.1} parent=1 // pred_check_branch
      %1260 = sbr.rel (0) target = $region41
    $region40: #{autodis_forward.1} parent=1 // pred_region
      %s1262 = ssub.s32 512, 512
      %1263 = vsyncadd [#allocation3], %s1262
      %s1265 = sshll.u32 [#allocation2], 4
      %s1266 = int_to_ptr.vmem [resolvable:$true] %s1265
      %1268 = dma.vmem_to_hbm [thread:$0]  %s1266, 512, %s9, [#allocation3]
    $region41: #{autodis_forward.1} parent=1 // pred_fallthru
      _
    // Predicated region
    $region42: #{autodis_forward.1} parent=1 // pred_check
      _
    $region43: #{autodis_forward.1} parent=1 // pred_check_branch
      %1270 = sbr.rel (0) target = $region45
    $region44: #{autodis_forward.1} parent=1 // pred_region
      %1271 = dma.done [#allocation3], 512
    $region45: #{autodis_forward.1} parent=1 // pred_fallthru
      _
    %1272 = vsyncpa [#allocation3], 1

</llo_original>
